<compile_context>
chip_gen: v6e
topology: v6e:2x2x1
jax: 0.10.0
libtpu: 0.0.40
codegen_flags: <defaults>
</compile_context>

<pallas_src>
import functools

import jax
import jax.numpy as jnp
from jax.experimental import pallas as pl
from jax.experimental.pallas import tpu as pltpu


# ---------------------------------------------------------------------------
# Kernels
# ---------------------------------------------------------------------------

def _conv3x3_rows(x_rows, wk_ref, out_w, compute_dtype):
    """sum_{dh,dw} W[dh,dw] (C_out,C_in) @ x_row[dh][:, dw:dw+out_w] -> (C_out,out_w) f32."""
    acc = None
    for dh in range(3):
        xr = x_rows[dh].astype(compute_dtype)            # (C_in, W+2)
        for dw in range(3):
            xs = xr[:, dw:dw + out_w]                    # (C_in, W)
            t = jnp.dot(wk_ref[dh * 3 + dw], xs,
                        preferred_element_type=jnp.float32)
            acc = t if acc is None else acc + t
    return acc


def _conv1_bn_relu_pad_kernel(x0, x1, x2, wk, sc, sh, o_ref, *,
                              out_w, out_h, compute_dtype):
    """relu(bn1(conv1(row))) written into an already-padded (C, W+2) output row.

    Grid covers out_h + 2 rows: rows 0 and out_h+1 are the zero H-halo rows.
    """
    h = pl.program_id(1)
    # Zero the full padded row (also zeroes the W-halo columns).
    o_ref[...] = jnp.zeros_like(o_ref)

    @pl.when(jnp.logical_and(h >= 1, h <= out_h))
    def _():
        y = _conv3x3_rows((x0[...], x1[...], x2[...]), wk, out_w, compute_dtype)
        y = jnp.maximum(y * sc[...] + sh[...], 0.0)
        o_ref[:, 1:out_w + 1] = y.astype(o_ref.dtype)


def _conv_bn_add_relu_kernel(x0, x1, x2, wk, sc, sh, res, o_ref, *,
                             out_w, compute_dtype):
    """conv3x3 + folded BN + identity residual + ReLU.  res: (C_out, W)."""
    y = _conv3x3_rows((x0[...], x1[...], x2[...]), wk, out_w, compute_dtype)
    y = y * sc[...] + sh[...] + res[...]
    o_ref[...] = jnp.maximum(y, 0.0).astype(o_ref.dtype)


def _conv_bn_proj_relu_kernel(x0, x1, x2, wk, sc, sh, xres, wsc, ssc, shsc, o_ref,
                              *, out_w, compute_dtype):
    """conv3x3 + folded BN + fused projection shortcut (1x1 conv + BN) + add + ReLU."""
    y = _conv3x3_rows((x0[...], x1[...], x2[...]), wk, out_w, compute_dtype)
    y = y * sc[...] + sh[...]
    r = jnp.dot(wsc[...], xres[...].astype(compute_dtype),
                preferred_element_type=jnp.float32)      # (C_out, W)
    y = y + (r * ssc[...] + shsc[...])
    o_ref[...] = jnp.maximum(y, 0.0).astype(o_ref.dtype)


# ---------------------------------------------------------------------------
# pallas_call builders
# ---------------------------------------------------------------------------

def _shifted_row_spec(n_ch, width, dh):
    """Row h+dh of an H-padded (B, Hp, C, Wp) tensor, one (C, Wp) slab."""
    return pl.BlockSpec((None, None, n_ch, width),
                        lambda b, h: (b, h + dh, 0, 0))


def _stage1_row_spec(n_ch, width, stride, dh, out_h):
    """Row clamp(h-1)*stride + dh of the H/W-padded input (boundary rows clamp)."""
    def imap(b, h):
        hh = jnp.clip(h - 1, 0, out_h - 1)
        return (b, hh * stride + dh, 0, 0)
    return pl.BlockSpec((None, None, n_ch, width), imap)


def _conv1_bn_relu_padded(xp, wk, scale, shift, *, stride, out_h, compute_dtype):
    """Stage 1: relu(bn1(conv1(x))), output already H/W-padded: (B, out_h+2, C_out, W+2)."""
    b_dim, _, c_in, wp = xp.shape
    c_out = wk.shape[1]
    out_w = wp - 2

    flops = 2 * b_dim * out_h * out_w * 9 * c_in * c_out
    bytes_acc = 4 * (3 * b_dim * out_h * c_in * wp + wk.size + 2 * c_out
                     + b_dim * (out_h + 2) * c_out * wp)

    kern = functools.partial(_conv1_bn_relu_pad_kernel, out_w=out_w, out_h=out_h,
                             compute_dtype=compute_dtype)
    return pl.pallas_call(
        kern,
        out_shape=jax.ShapeDtypeStruct((b_dim, out_h + 2, c_out, wp), jnp.float32),
        grid=(b_dim, out_h + 2),
        in_specs=[
            _stage1_row_spec(c_in, wp, stride, 0, out_h),
            _stage1_row_spec(c_in, wp, stride, 1, out_h),
            _stage1_row_spec(c_in, wp, stride, 2, out_h),
            pl.BlockSpec((9, c_out, c_in), lambda b, h: (0, 0, 0)),   # resident
            pl.BlockSpec((c_out, 1), lambda b, h: (0, 0)),            # resident
            pl.BlockSpec((c_out, 1), lambda b, h: (0, 0)),            # resident
        ],
        out_specs=pl.BlockSpec((None, None, c_out, wp),
                               lambda b, h: (b, h, 0, 0)),
        compiler_params=pltpu.CompilerParams(
            dimension_semantics=("parallel", "parallel")),
        cost_estimate=pl.CostEstimate(flops=flops, transcendentals=0,
                                      bytes_accessed=bytes_acc),
    )(xp, xp, xp, wk, scale, shift)


def _conv3x3_bn_residual(out1p, wk2, s2, b2, xt, shortcut, *, stride, out_h,
                         compute_dtype):
    """Stage 2: relu(bn2(conv2(out1)) + shortcut(x)), shortcut fused in-kernel."""
    b_dim, _, planes, wp = out1p.shape
    out_w = wp - 2
    c_in = xt.shape[2]

    in_specs = [
        _shifted_row_spec(planes, wp, 0),
        _shifted_row_spec(planes, wp, 1),
        _shifted_row_spec(planes, wp, 2),
        pl.BlockSpec((9, planes, planes), lambda b, h: (0, 0, 0)),
        pl.BlockSpec((planes, 1), lambda b, h: (0, 0)),
        pl.BlockSpec((planes, 1), lambda b, h: (0, 0)),
        # residual input: row h*stride of (un-padded) x in (B,H,C,W) layout
        pl.BlockSpec((None, None, c_in, out_w),
                     lambda b, h: (b, h * stride, 0, 0)),
    ]
    args = [out1p, out1p, out1p, wk2, s2, b2, xt]
    flops = 2 * b_dim * out_h * out_w * 9 * planes * planes
    bytes_acc = 4 * (3 * b_dim * out_h * planes * wp + wk2.size + 2 * planes
                     + b_dim * out_h * c_in * out_w + b_dim * out_h * planes * out_w)

    if shortcut is None:
        kern = functools.partial(_conv_bn_add_relu_kernel, out_w=out_w,
                                 compute_dtype=compute_dtype)
    else:
        wsc, ssc, shsc = shortcut            # (C_sc, C_in), (C_sc, 1), (C_sc, 1)
        c_sc = wsc.shape[0]
        in_specs += [
            pl.BlockSpec((c_sc, c_in), lambda b, h: (0, 0)),
            pl.BlockSpec((c_sc, 1), lambda b, h: (0, 0)),
            pl.BlockSpec((c_sc, 1), lambda b, h: (0, 0)),
        ]
        args += [wsc, ssc, shsc]
        flops += 2 * b_dim * out_h * out_w * c_in * c_sc
        bytes_acc += 4 * (wsc.size + 2 * c_sc)
        kern = functools.partial(_conv_bn_proj_relu_kernel, out_w=out_w,
                                 compute_dtype=compute_dtype)

    return pl.pallas_call(
        kern,
        out_shape=jax.ShapeDtypeStruct((b_dim, out_h, planes, out_w), jnp.float32),
        grid=(b_dim, out_h),
        in_specs=in_specs,
        out_specs=pl.BlockSpec((None, None, planes, out_w),
                               lambda b, h: (b, h, 0, 0)),
        compiler_params=pltpu.CompilerParams(
            dimension_semantics=("parallel", "parallel")),
        cost_estimate=pl.CostEstimate(flops=flops, transcendentals=0,
                                      bytes_accessed=bytes_acc),
    )(*args)


# ---------------------------------------------------------------------------
# Module wrapper
# ---------------------------------------------------------------------------

def _fold_bn(gamma, beta, mean, var, eps):
    scale = gamma / jnp.sqrt(var + eps)
    shift = beta - mean * scale
    return (scale.astype(jnp.float32).reshape(-1, 1),
            shift.astype(jnp.float32).reshape(-1, 1))


def basic_res_block(x, conv1_w, bn1, conv2_w, bn2, shortcut=None, *,
                    stride=1, eps=1e-5, compute_dtype=jnp.float32):
    """BasicResBlock forward (eval-mode BN).

    x:        (B, C_in, H, W) NCHW float32
    conv1_w:  (planes, C_in, 3, 3);  conv2_w: (planes, planes, 3, 3)
    bn1/bn2:  (gamma, beta, running_mean, running_var)
    shortcut: None (identity) or (conv_w (planes, C_in, 1, 1), bn_params)
    compute_dtype: jnp.float32, or jnp.bfloat16 to feed the MXU in bf16
                   (f32 accumulation) on v6e/v7x.
    """
    B, C_in, H, W = x.shape
    planes = conv1_w.shape[0]
    out_h = (H - 1) // stride + 1

    # Single layout change: NCHW -> (B, H, C, W).  All intermediates stay here.
    xt = jnp.transpose(x, (0, 2, 1, 3)).astype(jnp.float32)       # (B, H, C_in, W)
    xp = jnp.pad(xt, ((0, 0), (1, 1), (0, 0), (1, 1)))            # (B, H+2, C_in, W+2)

    wk1 = jnp.transpose(conv1_w, (2, 3, 0, 1)).reshape(9, planes, C_in)
    wk2 = jnp.transpose(conv2_w, (2, 3, 0, 1)).reshape(9, planes, planes)
    wk1 = wk1.astype(compute_dtype)
    wk2 = wk2.astype(compute_dtype)
    s1, b1 = _fold_bn(*bn1, eps)
    s2, b2 = _fold_bn(*bn2, eps)

    sc_args = None
    if shortcut is not None:
        sc_w, sc_bn = shortcut
        c_sc = sc_w.shape[0]
        if c_sc != planes:
            raise ValueError("projection shortcut must output `planes` channels "
                             "for the residual add to be well defined")
        wsc = sc_w.reshape(c_sc, C_in).astype(compute_dtype)
        ssc, shsc = _fold_bn(*sc_bn, eps)
        sc_args = (wsc, ssc, shsc)
    else:
        if stride != 1 or C_in != planes:
            raise ValueError("identity shortcut requires stride == 1 and "
                             "in_planes == planes")

    # Stage 1: relu(bn1(conv1(x))), producing the already-padded intermediate
    # (no extra XLA pad / HBM round trip between stages).
    out1p = _conv1_bn_relu_padded(xp, wk1, s1, b1, stride=stride, out_h=out_h,
                                  compute_dtype=compute_dtype)

    # Stage 2: relu(bn2(conv2(out1)) + shortcut(x))  (fused kernel).
    out = _conv3x3_bn_residual(out1p, wk2, s2, b2, xt, sc_args,
                               stride=stride, out_h=out_h,
                               compute_dtype=compute_dtype)

    # (B, H_out, planes, W) -> NCHW
    return jnp.transpose(out, (0, 2, 1, 3))


# ---------------------------------------------------------------------------
# Plain-JAX reference (mirrors PyTorch eval-mode forward)
# ---------------------------------------------------------------------------

def reference(x, conv1_w, bn1, conv2_w, bn2, shortcut=None, *, stride=1, eps=1e-5):
    def conv(x, w, s_hw, pad):
        return jax.lax.conv_general_dilated(
            x, w, window_strides=s_hw, padding=pad,
            dimension_numbers=("NCHW", "OIHW", "NCHW"),
            precision=jax.lax.Precision.HIGHEST)

    def bn(x, p):
        g, b, m, v = p
        inv = (g / jnp.sqrt(v + eps))[None, :, None, None]
        return (x - m[None, :, None, None]) * inv + b[None, :, None, None]

    out = jax.nn.relu(bn(conv(x, conv1_w, (stride, 1), ((1, 1), (1, 1))), bn1))
    out = bn(conv(out, conv2_w, (1, 1), ((1, 1), (1, 1))), bn2)
    if shortcut is not None:
        sc_w, sc_bn = shortcut
        sc = bn(conv(x, sc_w, (stride, 1), ((0, 0), (0, 0))), sc_bn)
    else:
        sc = x
    return jax.nn.relu(out + sc)


# ---------------------------------------------------------------------------
# Demo / correctness check
# ---------------------------------------------------------------------------

if __name__ == "__main__":
    key = jax.random.PRNGKey(0)

    def conv_init(k, c_out, c_in, ks):
        bound = 1.0 / float(c_in * ks * ks) ** 0.5
        return jax.random.uniform(k, (c_out, c_in, ks, ks), jnp.float32,
                                  minval=-bound, maxval=bound)

    def bn_init(k, c):
        k1, k2, k3, k4 = jax.random.split(k, 4)
        gamma = 1.0 + 0.1 * jax.random.normal(k1, (c,), jnp.float32)
        beta = 0.1 * jax.random.normal(k2, (c,), jnp.float32)
        mean = 0.1 * jax.random.normal(k3, (c,), jnp.float32)
        var = 0.5 + jax.random.uniform(k4, (c,), jnp.float32)
        return gamma, beta, mean, var

    # ---- Case 1: projection shortcut (stride=2, in_planes != planes) -------
    # W = 128 (campplus time axis) -> lane-dense stores.
    B, C_in, planes, H, W, stride = 2, 8, 16, 16, 128, 2
    keys = jax.random.split(key, 8)
    x = jax.random.normal(keys[0], (B, C_in, H, W), jnp.float32)
    w1 = conv_init(keys[1], planes, C_in, 3)
    w2 = conv_init(keys[2], planes, planes, 3)
    wsc = conv_init(keys[3], planes, C_in, 1)
    bn1 = bn_init(keys[4], planes)
    bn2 = bn_init(keys[5], planes)
    bnsc = bn_init(keys[6], planes)

    y = basic_res_block(x, w1, bn1, w2, bn2, shortcut=(wsc, bnsc), stride=stride)
    y = jax.block_until_ready(y)
    y_ref = reference(x, w1, bn1, w2, bn2, shortcut=(wsc, bnsc), stride=stride)
    assert y.shape == (B, planes, (H - 1) // stride + 1, W)
    assert jnp.allclose(y, y_ref, atol=1e-3, rtol=1e-3), \
        float(jnp.max(jnp.abs(y - y_ref)))

    # ---- Case 2: identity shortcut (stride=1, in_planes == planes) ---------
    C2 = 8
    x2 = jax.random.normal(keys[7], (B, C2, H, W), jnp.float32)
    k2 = jax.random.split(keys[7], 4)
    w1b = conv_init(k2[0], C2, C2, 3)
    w2b = conv_init(k2[1], C2, C2, 3)
    bn1b = bn_init(k2[2], C2)
    bn2b = bn_init(k2[3], C2)

    y2 = basic_res_block(x2, w1b, bn1b, w2b, bn2b, shortcut=None, stride=1)
    y2 = jax.block_until_ready(y2)
    y2_ref = reference(x2, w1b, bn1b, w2b, bn2b, shortcut=None, stride=1)
    assert jnp.allclose(y2, y2_ref, atol=1e-3, rtol=1e-3), \
        float(jnp.max(jnp.abs(y2 - y2_ref)))

    # ---- Case 3: bf16 MXU feed (v6e/v7x path), f32 accumulate --------------
    y_bf16 = basic_res_block(x, w1, bn1, w2, bn2, shortcut=(wsc, bnsc),
                             stride=stride, compute_dtype=jnp.bfloat16)
    y_bf16 = jax.block_until_ready(y_bf16)
    assert jnp.allclose(y_bf16, y_ref, atol=1e-1, rtol=5e-2), \
        float(jnp.max(jnp.abs(y_bf16 - y_ref)))

    print("KERNEL_OK")
</pallas_src>

<mosaic_0001>
module attributes {stable_mosaic.version = 11 : i64} {
  func.func @_conv1_bn_relu_pad_kernel(%arg0: i32, %arg1: i32, %arg2: memref<1x1x8x130xf32, #tpu.memory_space<vmem>>, %arg3: memref<1x1x8x130xf32, #tpu.memory_space<vmem>>, %arg4: memref<1x1x8x130xf32, #tpu.memory_space<vmem>>, %arg5: memref<9x16x8xf32, #tpu.memory_space<vmem>>, %arg6: memref<16x1xf32, #tpu.memory_space<vmem>>, %arg7: memref<16x1xf32, #tpu.memory_space<vmem>>, %arg8: memref<1x1x16x130xf32, #tpu.memory_space<vmem>>) attributes {dimension_semantics = [#tpu.dimension_semantics<parallel>, #tpu.dimension_semantics<parallel>], iteration_bounds = array<i64: 2, 10>, scalar_prefetch = 0 : i64, scratch_operands = 0 : i64, tpu.core_type = #tpu.core_type<tc>, window_params = [{transform_indices = @transform_0, window_bounds = array<i64: 1, 1, 8, 130>}, {transform_indices = @transform_1, window_bounds = array<i64: 1, 1, 8, 130>}, {transform_indices = @transform_2, window_bounds = array<i64: 1, 1, 8, 130>}, {pipeline_mode = #tpu.pipeline_mode<synchronous>, transform_indices = @transform_3, window_bounds = array<i64: 9, 16, 8>}, {pipeline_mode = #tpu.pipeline_mode<synchronous>, transform_indices = @transform_4, window_bounds = array<i64: 16, 1>}, {pipeline_mode = #tpu.pipeline_mode<synchronous>, transform_indices = @transform_5, window_bounds = array<i64: 16, 1>}, {transform_indices = @transform_6, window_bounds = array<i64: 1, 1, 16, 130>}]} {
    %cst = arith.constant 0.000000e+00 : f32
    %0 = vector.broadcast %cst : f32 to vector<16x130xf32>
    %c0 = arith.constant 0 : index
    %c0_0 = arith.constant 0 : index
    %c0_1 = arith.constant 0 : index
    %c0_2 = arith.constant 0 : index
    %1 = vector.load %arg8[%c0, %c0_0, %c0_1, %c0_2] : memref<1x1x16x130xf32, #tpu.memory_space<vmem>>, vector<1x1x16x130xf32>
    %2 = vector.shape_cast %1 : vector<1x1x16x130xf32> to vector<16x130xf32>
    %3 = vector.shape_cast %0 : vector<16x130xf32> to vector<1x1x16x130xf32>
    tpu.vector_store %arg8[%c0, %c0_0, %c0_1, %c0_2], %3 {strides = array<i32>} : memref<1x1x16x130xf32, #tpu.memory_space<vmem>>, vector<1x1x16x130xf32>,
    %c1_i32 = arith.constant 1 : i32
    %4 = arith.cmpi sge, %arg1, %c1_i32 : i32
    %c8_i32 = arith.constant 8 : i32
    %5 = arith.cmpi sle, %arg1, %c8_i32 : i32
    %6 = arith.andi %4, %5 : i1
    %7 = arith.extui %6 : i1 to i32
    %c0_i32 = arith.constant 0 : i32
    %8 = arith.cmpi ne, %7, %c0_i32 : i32
    scf.if %8 {
      %c0_3 = arith.constant 0 : index
      %c0_4 = arith.constant 0 : index
      %c0_5 = arith.constant 0 : index
      %c0_6 = arith.constant 0 : index
      %9 = vector.load %arg2[%c0_3, %c0_4, %c0_5, %c0_6] : memref<1x1x8x130xf32, #tpu.memory_space<vmem>>, vector<1x1x8x130xf32>
      %10 = vector.shape_cast %9 : vector<1x1x8x130xf32> to vector<8x130xf32>
      %c0_7 = arith.constant 0 : index
      %c0_8 = arith.constant 0 : index
      %c0_9 = arith.constant 0 : index
      %c0_10 = arith.constant 0 : index
      %11 = vector.load %arg3[%c0_7, %c0_8, %c0_9, %c0_10] : memref<1x1x8x130xf32, #tpu.memory_space<vmem>>, vector<1x1x8x130xf32>
      %12 = vector.shape_cast %11 : vector<1x1x8x130xf32> to vector<8x130xf32>
      %c0_11 = arith.constant 0 : index
      %c0_12 = arith.constant 0 : index
      %c0_13 = arith.constant 0 : index
      %c0_14 = arith.constant 0 : index
      %13 = vector.load %arg4[%c0_11, %c0_12, %c0_13, %c0_14] : memref<1x1x8x130xf32, #tpu.memory_space<vmem>>, vector<1x1x8x130xf32>
      %14 = vector.shape_cast %13 : vector<1x1x8x130xf32> to vector<8x130xf32>
      %15 = vector.extract_strided_slice %10 {offsets = [0, 0], sizes = [8, 128], strides = [1, 1]} : vector<8x130xf32> to vector<8x128xf32>
      %c0_15 = arith.constant 0 : index
      %c0_16 = arith.constant 0 : index
      %c0_17 = arith.constant 0 : index
      %16 = vector.load %arg5[%c0_15, %c0_16, %c0_17] : memref<9x16x8xf32, #tpu.memory_space<vmem>>, vector<1x16x8xf32>
      %17 = vector.shape_cast %16 : vector<1x16x8xf32> to vector<16x8xf32>
      %cst_18 = arith.constant dense<0.000000e+00> : vector<16x128xf32>
      %18 = tpu.matmul %17, %15, %cst_18 {dimension_numbers = #tpu.dot_dimension_numbers<[1], [0], [0], [1], [0, 0, 1, 1], [], []>} : vector<16x8xf32>, vector<8x128xf32>, vector<16x128xf32> -> vector<16x128xf32>
      %19 = vector.extract_strided_slice %10 {offsets = [0, 1], sizes = [8, 128], strides = [1, 1]} : vector<8x130xf32> to vector<8x128xf32>
      %c1 = arith.constant 1 : index
      %c0_19 = arith.constant 0 : index
      %c0_20 = arith.constant 0 : index
      %20 = vector.load %arg5[%c1, %c0_19, %c0_20] : memref<9x16x8xf32, #tpu.memory_space<vmem>>, vector<1x16x8xf32>
      %21 = vector.shape_cast %20 : vector<1x16x8xf32> to vector<16x8xf32>
      %cst_21 = arith.constant dense<0.000000e+00> : vector<16x128xf32>
      %22 = tpu.matmul %21, %19, %cst_21 {dimension_numbers = #tpu.dot_dimension_numbers<[1], [0], [0], [1], [0, 0, 1, 1], [], []>} : vector<16x8xf32>, vector<8x128xf32>, vector<16x128xf32> -> vector<16x128xf32>
      %23 = arith.addf %18, %22 : vector<16x128xf32>
      %24 = vector.extract_strided_slice %10 {offsets = [0, 2], sizes = [8, 128], strides = [1, 1]} : vector<8x130xf32> to vector<8x128xf32>
      %c2 = arith.constant 2 : index
      %c0_22 = arith.constant 0 : index
      %c0_23 = arith.constant 0 : index
      %25 = vector.load %arg5[%c2, %c0_22, %c0_23] : memref<9x16x8xf32, #tpu.memory_space<vmem>>, vector<1x16x8xf32>
      %26 = vector.shape_cast %25 : vector<1x16x8xf32> to vector<16x8xf32>
      %cst_24 = arith.constant dense<0.000000e+00> : vector<16x128xf32>
      %27 = tpu.matmul %26, %24, %cst_24 {dimension_numbers = #tpu.dot_dimension_numbers<[1], [0], [0], [1], [0, 0, 1, 1], [], []>} : vector<16x8xf32>, vector<8x128xf32>, vector<16x128xf32> -> vector<16x128xf32>
      %28 = arith.addf %23, %27 : vector<16x128xf32>
      %29 = vector.extract_strided_slice %12 {offsets = [0, 0], sizes = [8, 128], strides = [1, 1]} : vector<8x130xf32> to vector<8x128xf32>
      %c3 = arith.constant 3 : index
      %c0_25 = arith.constant 0 : index
      %c0_26 = arith.constant 0 : index
      %30 = vector.load %arg5[%c3, %c0_25, %c0_26] : memref<9x16x8xf32, #tpu.memory_space<vmem>>, vector<1x16x8xf32>
      %31 = vector.shape_cast %30 : vector<1x16x8xf32> to vector<16x8xf32>
      %cst_27 = arith.constant dense<0.000000e+00> : vector<16x128xf32>
      %32 = tpu.matmul %31, %29, %cst_27 {dimension_numbers = #tpu.dot_dimension_numbers<[1], [0], [0], [1], [0, 0, 1, 1], [], []>} : vector<16x8xf32>, vector<8x128xf32>, vector<16x128xf32> -> vector<16x128xf32>
      %33 = arith.addf %28, %32 : vector<16x128xf32>
      %34 = vector.extract_strided_slice %12 {offsets = [0, 1], sizes = [8, 128], strides = [1, 1]} : vector<8x130xf32> to vector<8x128xf32>
      %c4 = arith.constant 4 : index
      %c0_28 = arith.constant 0 : index
      %c0_29 = arith.constant 0 : index
      %35 = vector.load %arg5[%c4, %c0_28, %c0_29] : memref<9x16x8xf32, #tpu.memory_space<vmem>>, vector<1x16x8xf32>
      %36 = vector.shape_cast %35 : vector<1x16x8xf32> to vector<16x8xf32>
      %cst_30 = arith.constant dense<0.000000e+00> : vector<16x128xf32>
      %37 = tpu.matmul %36, %34, %cst_30 {dimension_numbers = #tpu.dot_dimension_numbers<[1], [0], [0], [1], [0, 0, 1, 1], [], []>} : vector<16x8xf32>, vector<8x128xf32>, vector<16x128xf32> -> vector<16x128xf32>
      %38 = arith.addf %33, %37 : vector<16x128xf32>
      %39 = vector.extract_strided_slice %12 {offsets = [0, 2], sizes = [8, 128], strides = [1, 1]} : vector<8x130xf32> to vector<8x128xf32>
      %c5 = arith.constant 5 : index
      %c0_31 = arith.constant 0 : index
      %c0_32 = arith.constant 0 : index
      %40 = vector.load %arg5[%c5, %c0_31, %c0_32] : memref<9x16x8xf32, #tpu.memory_space<vmem>>, vector<1x16x8xf32>
      %41 = vector.shape_cast %40 : vector<1x16x8xf32> to vector<16x8xf32>
      %cst_33 = arith.constant dense<0.000000e+00> : vector<16x128xf32>
      %42 = tpu.matmul %41, %39, %cst_33 {dimension_numbers = #tpu.dot_dimension_numbers<[1], [0], [0], [1], [0, 0, 1, 1], [], []>} : vector<16x8xf32>, vector<8x128xf32>, vector<16x128xf32> -> vector<16x128xf32>
      %43 = arith.addf %38, %42 : vector<16x128xf32>
      %44 = vector.extract_strided_slice %14 {offsets = [0, 0], sizes = [8, 128], strides = [1, 1]} : vector<8x130xf32> to vector<8x128xf32>
      %c6 = arith.constant 6 : index
      %c0_34 = arith.constant 0 : index
      %c0_35 = arith.constant 0 : index
      %45 = vector.load %arg5[%c6, %c0_34, %c0_35] : memref<9x16x8xf32, #tpu.memory_space<vmem>>, vector<1x16x8xf32>
      %46 = vector.shape_cast %45 : vector<1x16x8xf32> to vector<16x8xf32>
      %cst_36 = arith.constant dense<0.000000e+00> : vector<16x128xf32>
      %47 = tpu.matmul %46, %44, %cst_36 {dimension_numbers = #tpu.dot_dimension_numbers<[1], [0], [0], [1], [0, 0, 1, 1], [], []>} : vector<16x8xf32>, vector<8x128xf32>, vector<16x128xf32> -> vector<16x128xf32>
      %48 = arith.addf %43, %47 : vector<16x128xf32>
      %49 = vector.extract_strided_slice %14 {offsets = [0, 1], sizes = [8, 128], strides = [1, 1]} : vector<8x130xf32> to vector<8x128xf32>
      %c7 = arith.constant 7 : index
      %c0_37 = arith.constant 0 : index
      %c0_38 = arith.constant 0 : index
      %50 = vector.load %arg5[%c7, %c0_37, %c0_38] : memref<9x16x8xf32, #tpu.memory_space<vmem>>, vector<1x16x8xf32>
      %51 = vector.shape_cast %50 : vector<1x16x8xf32> to vector<16x8xf32>
      %cst_39 = arith.constant dense<0.000000e+00> : vector<16x128xf32>
      %52 = tpu.matmul %51, %49, %cst_39 {dimension_numbers = #tpu.dot_dimension_numbers<[1], [0], [0], [1], [0, 0, 1, 1], [], []>} : vector<16x8xf32>, vector<8x128xf32>, vector<16x128xf32> -> vector<16x128xf32>
      %53 = arith.addf %48, %52 : vector<16x128xf32>
      %54 = vector.extract_strided_slice %14 {offsets = [0, 2], sizes = [8, 128], strides = [1, 1]} : vector<8x130xf32> to vector<8x128xf32>
      %c8 = arith.constant 8 : index
      %c0_40 = arith.constant 0 : index
      %c0_41 = arith.constant 0 : index
      %55 = vector.load %arg5[%c8, %c0_40, %c0_41] : memref<9x16x8xf32, #tpu.memory_space<vmem>>, vector<1x16x8xf32>
      %56 = vector.shape_cast %55 : vector<1x16x8xf32> to vector<16x8xf32>
      %cst_42 = arith.constant dense<0.000000e+00> : vector<16x128xf32>
      %57 = tpu.matmul %56, %54, %cst_42 {dimension_numbers = #tpu.dot_dimension_numbers<[1], [0], [0], [1], [0, 0, 1, 1], [], []>} : vector<16x8xf32>, vector<8x128xf32>, vector<16x128xf32> -> vector<16x128xf32>
      %58 = arith.addf %53, %57 : vector<16x128xf32>
      %c0_43 = arith.constant 0 : index
      %c0_44 = arith.constant 0 : index
      %59 = vector.load %arg6[%c0_43, %c0_44] : memref<16x1xf32, #tpu.memory_space<vmem>>, vector<16x1xf32>
      %60 = vector.broadcast %59 : vector<16x1xf32> to vector<16x128xf32>
      %61 = arith.mulf %58, %60 : vector<16x128xf32>
      %c0_45 = arith.constant 0 : index
      %c0_46 = arith.constant 0 : index
      %62 = vector.load %arg7[%c0_45, %c0_46] : memref<16x1xf32, #tpu.memory_space<vmem>>, vector<16x1xf32>
      %63 = vector.broadcast %62 : vector<16x1xf32> to vector<16x128xf32>
      %64 = arith.addf %61, %63 : vector<16x128xf32>
      %cst_47 = arith.constant 0.000000e+00 : f32
      %65 = vector.broadcast %cst_47 : f32 to vector<16x128xf32>
      %66 = arith.maximumf %64, %65 : vector<16x128xf32>
      %c0_48 = arith.constant 0 : index
      %c0_49 = arith.constant 0 : index
      %c0_50 = arith.constant 0 : index
      %c1_51 = arith.constant 1 : index
      %67 = vector.load %arg8[%c0_48, %c0_49, %c0_50, %c1_51] : memref<1x1x16x130xf32, #tpu.memory_space<vmem>>, vector<1x1x16x128xf32>
      %68 = vector.shape_cast %67 : vector<1x1x16x128xf32> to vector<16x128xf32>
      %69 = vector.shape_cast %66 : vector<16x128xf32> to vector<1x1x16x128xf32>
      tpu.vector_store %arg8[%c0_48, %c0_49, %c0_50, %c1_51], %69 {strides = array<i32>} : memref<1x1x16x130xf32, #tpu.memory_space<vmem>>, vector<1x1x16x128xf32>,
    } else {
    }
    return
  }
  func.func @transform_0(%arg0: i32, %arg1: i32) -> (i32, i32, i32, i32) {
    %c1_i32 = arith.constant 1 : i32
    %0 = arith.subi %arg1, %c1_i32 : i32
    %c0_i32 = arith.constant 0 : i32
    %c7_i32 = arith.constant 7 : i32
    %1 = arith.maxsi %c0_i32, %0 : i32
    %2 = arith.minsi %c7_i32, %1 : i32
    %c2_i32 = arith.constant 2 : i32
    %3 = arith.muli %2, %c2_i32 : i32
    %c0_i32_0 = arith.constant 0 : i32
    %4 = arith.addi %3, %c0_i32_0 : i32
    %c0_i32_1 = arith.constant 0 : i32
    %c0_i32_2 = arith.constant 0 : i32
    %c0_i32_3 = arith.constant 0 : i32
    return %arg0, %4, %c0_i32_1, %c0_i32_2 : i32, i32, i32, i32
  }
  func.func @transform_1(%arg0: i32, %arg1: i32) -> (i32, i32, i32, i32) {
    %c1_i32 = arith.constant 1 : i32
    %0 = arith.subi %arg1, %c1_i32 : i32
    %c0_i32 = arith.constant 0 : i32
    %c7_i32 = arith.constant 7 : i32
    %1 = arith.maxsi %c0_i32, %0 : i32
    %2 = arith.minsi %c7_i32, %1 : i32
    %c2_i32 = arith.constant 2 : i32
    %3 = arith.muli %2, %c2_i32 : i32
    %c1_i32_0 = arith.constant 1 : i32
    %4 = arith.addi %3, %c1_i32_0 : i32
    %c0_i32_1 = arith.constant 0 : i32
    %c0_i32_2 = arith.constant 0 : i32
    %c0_i32_3 = arith.constant 0 : i32
    return %arg0, %4, %c0_i32_1, %c0_i32_2 : i32, i32, i32, i32
  }
  func.func @transform_2(%arg0: i32, %arg1: i32) -> (i32, i32, i32, i32) {
    %c1_i32 = arith.constant 1 : i32
    %0 = arith.subi %arg1, %c1_i32 : i32
    %c0_i32 = arith.constant 0 : i32
    %c7_i32 = arith.constant 7 : i32
    %1 = arith.maxsi %c0_i32, %0 : i32
    %2 = arith.minsi %c7_i32, %1 : i32
    %c2_i32 = arith.constant 2 : i32
    %3 = arith.muli %2, %c2_i32 : i32
    %c2_i32_0 = arith.constant 2 : i32
    %4 = arith.addi %3, %c2_i32_0 : i32
    %c0_i32_1 = arith.constant 0 : i32
    %c0_i32_2 = arith.constant 0 : i32
    %c0_i32_3 = arith.constant 0 : i32
    return %arg0, %4, %c0_i32_1, %c0_i32_2 : i32, i32, i32, i32
  }
  func.func @transform_3(%arg0: i32, %arg1: i32) -> (i32, i32, i32) {
    %c0_i32 = arith.constant 0 : i32
    %c0_i32_0 = arith.constant 0 : i32
    %c0_i32_1 = arith.constant 0 : i32
    %c0_i32_2 = arith.constant 0 : i32
    return %c0_i32, %c0_i32_0, %c0_i32_1 : i32, i32, i32
  }
  func.func @transform_4(%arg0: i32, %arg1: i32) -> (i32, i32) {
    %c0_i32 = arith.constant 0 : i32
    %c0_i32_0 = arith.constant 0 : i32
    %c0_i32_1 = arith.constant 0 : i32
    return %c0_i32, %c0_i32_0 : i32, i32
  }
  func.func @transform_5(%arg0: i32, %arg1: i32) -> (i32, i32) {
    %c0_i32 = arith.constant 0 : i32
    %c0_i32_0 = arith.constant 0 : i32
    %c0_i32_1 = arith.constant 0 : i32
    return %c0_i32, %c0_i32_0 : i32, i32
  }
  func.func @transform_6(%arg0: i32, %arg1: i32) -> (i32, i32, i32, i32) {
    %c0_i32 = arith.constant 0 : i32
    %c0_i32_0 = arith.constant 0 : i32
    %c0_i32_1 = arith.constant 0 : i32
    return %arg0, %arg1, %c0_i32, %c0_i32_0 : i32, i32, i32, i32
  }
}

</mosaic_0001>

<llo_original>
// kernel: tpu_custom_call.1
$region0: #{tpu_custom_call.1}
  #allocation0 [shape = 'u32[]', space=smem, size = 0x4, offset = 0x4, fixed_abs, tag = 'smem constant byte address 0x4 - core index']
  #allocation1 [shape = 'u32[144,128]{1,0:T(1,128)}', space=vmem, size = 0x12000, scoped, tag = 'internal scratch']
  %s0 = inlined_call_operand.hbm [shape: f32[2,18,8,130], index: 0, kind: input, shape index: {}]
  %s1 = inlined_call_operand.hbm [shape: f32[2,18,8,130], index: 1, kind: input, shape index: {}]
  %s2 = inlined_call_operand.hbm [shape: f32[2,18,8,130], index: 2, kind: input, shape index: {}]
  %s3 = inlined_call_operand.vmem [shape: f32[9,16,8], index: 3, kind: input, shape index: {}]
  %s4 = inlined_call_operand.vmem [shape: f32[16,1], index: 4, kind: input, shape index: {}]
  %s5 = inlined_call_operand.vmem [shape: f32[16,1], index: 5, kind: input, shape index: {}]
  %s6 = inlined_call_operand.hbm [shape: f32[2,10,16,130], index: 6, kind: output, shape index: {}]
  %s7 = sld [smem:[#allocation0]]
  $region73: #{tpu_custom_call.1} parent=0
    _
  %s9 = ssub.s32 1, %s7
  %s10 = scalar_select 0, %s9, %s7
  $region1: #{tpu_custom_call.1} parent=0
    #allocation2 [shape = 'u8[16384]{0}', space=vmem, size = 0x4000, scoped, tag = 'input window, operand 0']
    #allocation3 [shape = 's32[2]{0}', space=sflag, size = 0x8, scoped, tag = 'scoped memory for tpu_custom_call.1']
    #allocation4 [shape = 's32[2]{0}', space=sflag, size = 0x8, scoped, tag = 'scoped memory for tpu_custom_call.1']
    #allocation5 [shape = 'u8[16384]{0}', space=vmem, size = 0x4000, scoped, tag = 'input window, operand 1']
    #allocation6 [shape = 's32[2]{0}', space=sflag, size = 0x8, scoped, tag = 'scoped memory for tpu_custom_call.1']
    #allocation7 [shape = 'u8[16384]{0}', space=vmem, size = 0x4000, scoped, tag = 'input window, operand 2']
    #allocation8 [shape = 'u8[32768]{0}', space=vmem, size = 0x8000, scoped, tag = 'output window, operand 0']
    %11 = vsyncpa [#allocation3], 0
    %s12 = scalar_lea.sflag [#allocation3], 1
    %13 = vsyncpa %s12, 0
    %14 = vsyncpa [#allocation6], 0
    %s15 = scalar_lea.sflag [#allocation6], 1
    %16 = vsyncpa %s15, 0
    %17 = vsyncpa [#allocation4], 0
    %s18 = scalar_lea.sflag [#allocation4], 1
    %19 = vsyncpa %s18, 0
    loop: start=0, step=1, limit=22
    $region2: #{tpu_custom_call.1} parent=1 // loop_pre_header
      _
    $region3: #{tpu_custom_call.1} parent=1 // loop_header
      %s21 = sphi 0, %s25
      %p22 = scmp.ge.s32.totalorder %s21, 22
      %s28 = sphi 0, %s40
      %s29 = sphi 0, %s36
      %s30 = sphi 0, %s28
      %s31 = sphi 0, %s29
      %s32 = sphi 0, %s30
      %s33 = sphi 0, %s31
      %s57 = sphi 0, %s59
      %s60 = sphi 0, %s57
      %s61 = sphi 0, %s60
      %s77 = sphi 0, %s61
      %s99 = sphi 0, %s101
      %s102 = sphi 0, %s99
      %s103 = sphi 0, %s102
      %s119 = sphi 0, %s103
      %s141 = sphi 0, %s143
      %s144 = sphi 0, %s141
      %s145 = sphi 0, %s144
      %s161 = sphi 0, %s145
      %s165 = sphi 0, %s165
      %s167 = sphi 0, %s165
      %s168 = sphi 0, %s167
      %s182 = sphi 0, %s168
      %s186 = sphi 0, %s186
      %s188 = sphi 0, %s186
      %s189 = sphi 0, %s188
      %s203 = sphi 0, %s189
      %s207 = sphi 0, %s207
      %s209 = sphi 0, %s207
      %s210 = sphi 0, %s209
      %s224 = sphi 0, %s210
      %s232 = sphi 0, %s234
      %s235 = sphi 0, %s232
      %s236 = sphi 0, %s235
      %s252 = sphi 0, %s236
    $region4: #{tpu_custom_call.1} parent=1 // loop_header_branch
      %24 = sbr.rel (%p22) target = $region8
    $region5: #{tpu_custom_call.1} parent=1 // loop_body
      %s26 = ssub.s32 %s21, 1
      %s27 = ssub.s32 %s21, 2
      %s34 = sadd.s32 1, %s29
      %p35 = scmp.ge.s32.totalorder %s34, 10
      %s36 = scalar_select %p35, 0, %s34
      %s37 = sadd.s32 1, %s28
      %s38 = scalar_select %p35, %s37, %s28
      %p39 = scmp.ge.s32.totalorder %s38, 2
      %s40 = scalar_select %p39, 0, %s38
      %s41 = ssub.s32 %s29, 1
      %p42 = scmp.gt.s32.totalorder %s41, 0
      %s43 = scalar_select %p42, %s41, 0
      %p44 = scmp.lt.s32.totalorder %s43, 7
      %s45 = scalar_select %p44, %s43, 7
      %s46 = smul.u32 %s45, 2
      %s47 = ssub.s32 %s36, 1
      %p48 = scmp.gt.s32.totalorder %s47, 0
      %s49 = scalar_select %p48, %s47, 0
      %p50 = scmp.lt.s32.totalorder %s49, 7
      %s51 = scalar_select %p50, %s49, 7
      %s52 = smul.u32 %s51, 2
      %s53 = ssub.s32 %s28, %s40
      %s54 = ssub.s32 %s46, %s52
      %s55 = sor.u32 %s53, %s54
      %p56 = scmp.eq.s32.totalorder %s55, 0
      %s58 = sadd.s32 %s57, 1
      %s59 = scalar_select %p56, %s57, %s58
      %p62 = pneg %p56
      %p63 = scmp.eq.s32.totalorder %s21, 19
      %p64 = por %p62, %p63
      %p65 = scmp.ne.s32.totalorder %s57, %s60
      %p66 = scmp.eq.s32.totalorder %s21, 0
      %p67 = por %p65, %p66
      %p68 = scmp.ne.s32.totalorder %s57, %s60
      %p69 = scmp.eq.s32.totalorder %s26, 19
      %p70 = por %p68, %p69
      %p71 = scmp.ne.s32.totalorder %s60, %s61
      %p72 = scmp.eq.s32.totalorder %s26, 0
      %p73 = por %p71, %p72
      %p74 = scmp.ne.s32.totalorder %s60, %s61
      %p75 = scmp.eq.s32.totalorder %s27, 19
      %p76 = por %p74, %p75
      %p78 = scmp.ne.s32.totalorder %s61, %s77
      %p79 = scmp.eq.s32.totalorder %s27, 0
      %p80 = por %p78, %p79
      %s81 = ssub.s32 %s29, 1
      %p82 = scmp.gt.s32.totalorder %s81, 0
      %s83 = scalar_select %p82, %s81, 0
      %p84 = scmp.lt.s32.totalorder %s83, 7
      %s85 = scalar_select %p84, %s83, 7
      %s86 = smul.u32 %s85, 2
      %s87 = sadd.s32 %s86, 1
      %s88 = ssub.s32 %s36, 1
      %p89 = scmp.gt.s32.totalorder %s88, 0
      %s90 = scalar_select %p89, %s88, 0
      %p91 = scmp.lt.s32.totalorder %s90, 7
      %s92 = scalar_select %p91, %s90, 7
      %s93 = smul.u32 %s92, 2
      %s94 = sadd.s32 %s93, 1
      %s95 = ssub.s32 %s28, %s40
      %s96 = ssub.s32 %s87, %s94
      %s97 = sor.u32 %s95, %s96
      %p98 = scmp.eq.s32.totalorder %s97, 0
      %s100 = sadd.s32 %s99, 1
      %s101 = scalar_select %p98, %s99, %s100
      %p104 = pneg %p98
      %p105 = scmp.eq.s32.totalorder %s21, 19
      %p106 = por %p104, %p105
      %p107 = scmp.ne.s32.totalorder %s99, %s102
      %p108 = scmp.eq.s32.totalorder %s21, 0
      %p109 = por %p107, %p108
      %p110 = scmp.ne.s32.totalorder %s99, %s102
      %p111 = scmp.eq.s32.totalorder %s26, 19
      %p112 = por %p110, %p111
      %p113 = scmp.ne.s32.totalorder %s102, %s103
      %p114 = scmp.eq.s32.totalorder %s26, 0
      %p115 = por %p113, %p114
      %p116 = scmp.ne.s32.totalorder %s102, %s103
      %p117 = scmp.eq.s32.totalorder %s27, 19
      %p118 = por %p116, %p117
      %p120 = scmp.ne.s32.totalorder %s103, %s119
      %p121 = scmp.eq.s32.totalorder %s27, 0
      %p122 = por %p120, %p121
      %s123 = ssub.s32 %s29, 1
      %p124 = scmp.gt.s32.totalorder %s123, 0
      %s125 = scalar_select %p124, %s123, 0
      %p126 = scmp.lt.s32.totalorder %s125, 7
      %s127 = scalar_select %p126, %s125, 7
      %s128 = smul.u32 %s127, 2
      %s129 = sadd.s32 %s128, 2
      %s130 = ssub.s32 %s36, 1
      %p131 = scmp.gt.s32.totalorder %s130, 0
      %s132 = scalar_select %p131, %s130, 0
      %p133 = scmp.lt.s32.totalorder %s132, 7
      %s134 = scalar_select %p133, %s132, 7
      %s135 = smul.u32 %s134, 2
      %s136 = sadd.s32 %s135, 2
      %s137 = ssub.s32 %s28, %s40
      %s138 = ssub.s32 %s129, %s136
      %s139 = sor.u32 %s137, %s138
      %p140 = scmp.eq.s32.totalorder %s139, 0
      %s142 = sadd.s32 %s141, 1
      %s143 = scalar_select %p140, %s141, %s142
      %p146 = pneg %p140
      %p147 = scmp.eq.s32.totalorder %s21, 19
      %p148 = por %p146, %p147
      %p149 = scmp.ne.s32.totalorder %s141, %s144
      %p150 = scmp.eq.s32.totalorder %s21, 0
      %p151 = por %p149, %p150
      %p152 = scmp.ne.s32.totalorder %s141, %s144
      %p153 = scmp.eq.s32.totalorder %s26, 19
      %p154 = por %p152, %p153
      %p155 = scmp.ne.s32.totalorder %s144, %s145
      %p156 = scmp.eq.s32.totalorder %s26, 0
      %p157 = por %p155, %p156
      %p158 = scmp.ne.s32.totalorder %s144, %s145
      %p159 = scmp.eq.s32.totalorder %s27, 19
      %p160 = por %p158, %p159
      %p162 = scmp.ne.s32.totalorder %s145, %s161
      %p163 = scmp.eq.s32.totalorder %s27, 0
      %p164 = por %p162, %p163
      %s166 = sadd.s32 %s165, 1
      %p169 = scmp.eq.s32.totalorder %s21, 19
      %p170 = scmp.ne.s32.totalorder %s165, %s167
      %p171 = scmp.eq.s32.totalorder %s21, 0
      %p172 = por %p170, %p171
      %p173 = scmp.ne.s32.totalorder %s165, %s167
      %p174 = scmp.eq.s32.totalorder %s26, 19
      %p175 = por %p173, %p174
      %p176 = scmp.ne.s32.totalorder %s167, %s168
      %p177 = scmp.eq.s32.totalorder %s26, 0
      %p178 = por %p176, %p177
      %p179 = scmp.ne.s32.totalorder %s167, %s168
      %p180 = scmp.eq.s32.totalorder %s27, 19
      %p181 = por %p179, %p180
      %p183 = scmp.ne.s32.totalorder %s168, %s182
      %p184 = scmp.eq.s32.totalorder %s27, 0
      %p185 = por %p183, %p184
      %s187 = sadd.s32 %s186, 1
      %p190 = scmp.eq.s32.totalorder %s21, 19
      %p191 = scmp.ne.s32.totalorder %s186, %s188
      %p192 = scmp.eq.s32.totalorder %s21, 0
      %p193 = por %p191, %p192
      %p194 = scmp.ne.s32.totalorder %s186, %s188
      %p195 = scmp.eq.s32.totalorder %s26, 19
      %p196 = por %p194, %p195
      %p197 = scmp.ne.s32.totalorder %s188, %s189
      %p198 = scmp.eq.s32.totalorder %s26, 0
      %p199 = por %p197, %p198
      %p200 = scmp.ne.s32.totalorder %s188, %s189
      %p201 = scmp.eq.s32.totalorder %s27, 19
      %p202 = por %p200, %p201
      %p204 = scmp.ne.s32.totalorder %s189, %s203
      %p205 = scmp.eq.s32.totalorder %s27, 0
      %p206 = por %p204, %p205
      %s208 = sadd.s32 %s207, 1
      %p211 = scmp.eq.s32.totalorder %s21, 19
      %p212 = scmp.ne.s32.totalorder %s207, %s209
      %p213 = scmp.eq.s32.totalorder %s21, 0
      %p214 = por %p212, %p213
      %p215 = scmp.ne.s32.totalorder %s207, %s209
      %p216 = scmp.eq.s32.totalorder %s26, 19
      %p217 = por %p215, %p216
      %p218 = scmp.ne.s32.totalorder %s209, %s210
      %p219 = scmp.eq.s32.totalorder %s26, 0
      %p220 = por %p218, %p219
      %p221 = scmp.ne.s32.totalorder %s209, %s210
      %p222 = scmp.eq.s32.totalorder %s27, 19
      %p223 = por %p221, %p222
      %p225 = scmp.ne.s32.totalorder %s210, %s224
      %p226 = scmp.eq.s32.totalorder %s27, 0
      %p227 = por %p225, %p226
      %s228 = ssub.s32 %s28, %s40
      %s229 = ssub.s32 %s29, %s36
      %s230 = sor.u32 %s228, %s229
      %p231 = scmp.eq.s32.totalorder %s230, 0
      %s233 = sadd.s32 %s232, 1
      %s234 = scalar_select %p231, %s232, %s233
      %p237 = pneg %p231
      %p238 = scmp.eq.s32.totalorder %s21, 19
      %p239 = por %p237, %p238
      %p240 = scmp.ne.s32.totalorder %s232, %s235
      %p241 = scmp.eq.s32.totalorder %s21, 0
      %p242 = por %p240, %p241
      %p243 = scmp.ne.s32.totalorder %s232, %s235
      %p244 = scmp.eq.s32.totalorder %s26, 19
      %p245 = por %p243, %p244
      %p246 = scmp.ne.s32.totalorder %s235, %s236
      %p247 = scmp.eq.s32.totalorder %s26, 0
      %p248 = por %p246, %p247
      %p249 = scmp.ne.s32.totalorder %s235, %s236
      %p250 = scmp.eq.s32.totalorder %s27, 19
      %p251 = por %p249, %p250
      %p253 = scmp.ne.s32.totalorder %s236, %s252
      %p254 = scmp.eq.s32.totalorder %s27, 0
      %p255 = por %p253, %p254
      %p256 = scmp.le.s32.totalorder 1, %s21
      %p257 = scmp.lt.s32.totalorder %s21, 21
      %p258 = pnand %p256, %p257
      %p259 = pneg %p258
      // Predicated region
      $region9: #{tpu_custom_call.1} parent=5 // pred_check
        _
      $region10: #{tpu_custom_call.1} parent=5 // pred_check_branch
        %261 = sbr.rel (%p258) target = $region12
      $region11: #{tpu_custom_call.1} parent=5 // pred_region
        %s262 = ssub.s32 %s21, 1
        // Predicated region
        $region13: #{tpu_custom_call.1} parent=11 // pred_check
          %p263 = pneg %p178
        $region14: #{tpu_custom_call.1} parent=11 // pred_check_branch
          %265 = sbr.rel (%p263) target = $region16
        $region15: #{tpu_custom_call.1} parent=11 // pred_region
          _
        $region16: #{tpu_custom_call.1} parent=11 // pred_fallthru
          _
        // Predicated region
        $region17: #{tpu_custom_call.1} parent=11 // pred_check
          %p266 = pneg %p199
        $region18: #{tpu_custom_call.1} parent=11 // pred_check_branch
          %268 = sbr.rel (%p266) target = $region20
        $region19: #{tpu_custom_call.1} parent=11 // pred_region
          _
        $region20: #{tpu_custom_call.1} parent=11 // pred_fallthru
          _
        // Predicated region
        $region21: #{tpu_custom_call.1} parent=11 // pred_check
          %p269 = pneg %p220
        $region22: #{tpu_custom_call.1} parent=11 // pred_check_branch
          %271 = sbr.rel (%p269) target = $region24
        $region23: #{tpu_custom_call.1} parent=11 // pred_region
          _
        $region24: #{tpu_custom_call.1} parent=11 // pred_fallthru
          _
      $region12: #{tpu_custom_call.1} parent=5 // pred_fallthru
        _
      %p272 = scmp.lt.s32.totalorder %s21, 20
      // Predicated region
      $region25: #{tpu_custom_call.1} parent=5 // pred_check
        %p273 = pneg %p272
      $region26: #{tpu_custom_call.1} parent=5 // pred_check_branch
        %275 = sbr.rel (%p273) target = $region28
      $region27: #{tpu_custom_call.1} parent=5 // pred_region
        // Predicated region
        $region29: #{tpu_custom_call.1} parent=27 // pred_check
          %p276 = pneg %p67
        $region30: #{tpu_custom_call.1} parent=27 // pred_check_branch
          %278 = sbr.rel (%p276) target = $region32
        $region31: #{tpu_custom_call.1} parent=27 // pred_region
          %s279 = sand.u32 %s57, 1
          %s280 = scalar_lea.sflag [#allocation3], %s279
          %s281 = sand.u32 %s57, 1
          %s282 = smul.addr %s281, 16
          %s283 = scalar_lea.vmem [#allocation2], %s282
          %s284 = ssub.s32 %s29, 1
          %p285 = scmp.gt.s32.totalorder %s284, 0
          %s286 = scalar_select %p285, %s284, 0
          %p287 = scmp.lt.s32.totalorder %s286, 7
          %s288 = scalar_select %p287, %s286, 7
          %s289 = smul.u32 %s288, 2
          %s291 = ssub.s32 256, 256
          %292 = vsyncadd %s280, %s291
          %s293 = smul.addr %s289, 2
          %s294 = smul.addr %s28, 36
          %s295 = sadd.s32 %s293, %s294
          %s296 = smul.addr %s295, 128
          %s297 = scalar_lea.hbm %s0, %s296
          %s299 = sshll.u32 %s283, 4
          %s300 = int_to_ptr.vmem [resolvable:$true] %s299
          %302 = dma.hbm_to_vmem [thread:$0]  %s297, 256, %s300, %s280
        $region32: #{tpu_custom_call.1} parent=27 // pred_fallthru
          _
        // Predicated region
        $region33: #{tpu_custom_call.1} parent=27 // pred_check
          %p303 = pneg %p109
        $region34: #{tpu_custom_call.1} parent=27 // pred_check_branch
          %305 = sbr.rel (%p303) target = $region36
        $region35: #{tpu_custom_call.1} parent=27 // pred_region
          %s306 = sand.u32 %s21, 1
          %s307 = scalar_lea.sflag [#allocation6], %s306
          %s308 = sand.u32 %s99, 1
          %s309 = smul.addr %s308, 16
          %s310 = scalar_lea.vmem [#allocation5], %s309
          %s311 = ssub.s32 %s29, 1
          %p312 = scmp.gt.s32.totalorder %s311, 0
          %s313 = scalar_select %p312, %s311, 0
          %p314 = scmp.lt.s32.totalorder %s313, 7
          %s315 = scalar_select %p314, %s313, 7
          %s316 = smul.u32 %s315, 2
          %s317 = sadd.s32 %s316, 1
          %s319 = ssub.s32 256, 256
          %320 = vsyncadd %s307, %s319
          %s321 = smul.addr %s317, 2
          %s322 = smul.addr %s28, 36
          %s323 = sadd.s32 %s321, %s322
          %s324 = smul.addr %s323, 128
          %s325 = scalar_lea.hbm %s1, %s324
          %s327 = sshll.u32 %s310, 4
          %s328 = int_to_ptr.vmem [resolvable:$true] %s327
          %330 = dma.hbm_to_vmem [thread:$0]  %s325, 256, %s328, %s307
        $region36: #{tpu_custom_call.1} parent=27 // pred_fallthru
          _
        // Predicated region
        $region37: #{tpu_custom_call.1} parent=27 // pred_check
          %p331 = pneg %p151
        $region38: #{tpu_custom_call.1} parent=27 // pred_check_branch
          %333 = sbr.rel (%p331) target = $region40
        $region39: #{tpu_custom_call.1} parent=27 // pred_region
          %s334 = sand.u32 %s21, 1
          %s335 = scalar_lea.sflag [#allocation6], %s334
          %s336 = sand.u32 %s141, 1
          %s337 = smul.addr %s336, 16
          %s338 = scalar_lea.vmem [#allocation7], %s337
          %s339 = ssub.s32 %s29, 1
          %p340 = scmp.gt.s32.totalorder %s339, 0
          %s341 = scalar_select %p340, %s339, 0
          %p342 = scmp.lt.s32.totalorder %s341, 7
          %s343 = scalar_select %p342, %s341, 7
          %s344 = smul.u32 %s343, 2
          %s345 = sadd.s32 %s344, 2
          %s347 = ssub.s32 256, 256
          %348 = vsyncadd %s335, %s347
          %s349 = smul.addr %s345, 2
          %s350 = smul.addr %s28, 36
          %s351 = sadd.s32 %s349, %s350
          %s352 = smul.addr %s351, 128
          %s353 = scalar_lea.hbm %s2, %s352
          %s355 = sshll.u32 %s338, 4
          %s356 = int_to_ptr.vmem [resolvable:$true] %s355
          %358 = dma.hbm_to_vmem [thread:$0]  %s353, 256, %s356, %s335
        $region40: #{tpu_custom_call.1} parent=27 // pred_fallthru
          _
      $region28: #{tpu_custom_call.1} parent=5 // pred_fallthru
        _
      %p359 = scmp.le.s32.totalorder 1, %s21
      %p360 = scmp.lt.s32.totalorder %s21, 21
      %p361 = pnand %p359, %p360
      %p362 = pneg %p361
      // Predicated region
      $region41: #{tpu_custom_call.1} parent=5 // pred_check
        _
      $region42: #{tpu_custom_call.1} parent=5 // pred_check_branch
        %364 = sbr.rel (%p361) target = $region44
      $region43: #{tpu_custom_call.1} parent=5 // pred_region
        %s365 = ssub.s32 %s21, 1
        %s366 = sand.u32 %s60, 1
        %s367 = scalar_lea.sflag [#allocation3], %s366
        %s368 = sand.u32 %s60, 1
        %s369 = smul.addr %s368, 16
        %s370 = scalar_lea.vmem [#allocation2], %s369
        // Predicated region
        $region45: #{tpu_custom_call.1} parent=43 // pred_check
          %p371 = pneg %p73
        $region46: #{tpu_custom_call.1} parent=43 // pred_check_branch
          %373 = sbr.rel (%p371) target = $region48
        $region47: #{tpu_custom_call.1} parent=43 // pred_region
          %374 = dma.done %s367, 256
        $region48: #{tpu_custom_call.1} parent=43 // pred_fallthru
          _
        %s375 = sand.u32 %s26, 1
        %s376 = scalar_lea.sflag [#allocation6], %s375
        %s377 = sand.u32 %s102, 1
        %s378 = smul.addr %s377, 16
        %s379 = scalar_lea.vmem [#allocation5], %s378
        // Predicated region
        $region49: #{tpu_custom_call.1} parent=43 // pred_check
          %p380 = pneg %p115
        $region50: #{tpu_custom_call.1} parent=43 // pred_check_branch
          %382 = sbr.rel (%p380) target = $region52
        $region51: #{tpu_custom_call.1} parent=43 // pred_region
          %383 = dma.done %s376, 256
        $region52: #{tpu_custom_call.1} parent=43 // pred_fallthru
          _
        %s384 = sand.u32 %s26, 1
        %s385 = scalar_lea.sflag [#allocation6], %s384
        %s386 = sand.u32 %s144, 1
        %s387 = smul.addr %s386, 16
        %s388 = scalar_lea.vmem [#allocation7], %s387
        // Predicated region
        $region53: #{tpu_custom_call.1} parent=43 // pred_check
          %p389 = pneg %p157
        $region54: #{tpu_custom_call.1} parent=43 // pred_check_branch
          %391 = sbr.rel (%p389) target = $region56
        $region55: #{tpu_custom_call.1} parent=43 // pred_region
          %392 = dma.done %s385, 256
        $region56: #{tpu_custom_call.1} parent=43 // pred_fallthru
          _
        %s393 = sand.u32 %s60, 1
        %s394 = scalar_lea.sflag [#allocation3], %s393
        %s395 = sand.u32 %s60, 1
        %s396 = smul.addr %s395, 16
        %s397 = scalar_lea.vmem [#allocation2], %s396
        %p398 = pneg %p73
        %p399 = pneg %p70
        %s400 = sand.u32 %s26, 1
        %s401 = scalar_lea.sflag [#allocation6], %s400
        %s402 = sand.u32 %s102, 1
        %s403 = smul.addr %s402, 16
        %s404 = scalar_lea.vmem [#allocation5], %s403
        %p405 = pneg %p115
        %p406 = pneg %p112
        %s407 = sand.u32 %s26, 1
        %s408 = scalar_lea.sflag [#allocation6], %s407
        %s409 = sand.u32 %s144, 1
        %s410 = smul.addr %s409, 16
        %s411 = scalar_lea.vmem [#allocation7], %s410
        %p412 = pneg %p157
        %p413 = pneg %p154
        %p414 = pneg %p178
        %p415 = pneg %p175
        %p416 = pneg %p199
        %p417 = pneg %p196
        %p418 = pneg %p220
        %p419 = pneg %p217
        %p420 = pneg %p248
        %p421 = pneg %p245
        %s422 = sand.u32 %s235, 1
        %s423 = scalar_lea.sflag [#allocation4], %s422
        %s424 = sand.u32 %s235, 1
        %s425 = smul.addr %s424, 32
        %s426 = scalar_lea.vmem [#allocation8], %s425
        %s427 = ssub.s32 %s31, 1
        %p428 = scmp.gt.s32.totalorder %s427, 0
        %s429 = scalar_select %p428, %s427, 0
        %p430 = scmp.lt.s32.totalorder %s429, 7
        %s431 = scalar_select %p430, %s429, 7
        %s432 = smul.u32 %s431, 2
        %s433 = ssub.s32 %s31, 1
        %p434 = scmp.gt.s32.totalorder %s433, 0
        %s435 = scalar_select %p434, %s433, 0
        %p436 = scmp.lt.s32.totalorder %s435, 7
        %s437 = scalar_select %p436, %s435, 7
        %s438 = smul.u32 %s437, 2
        %s439 = sadd.s32 %s438, 1
        %s440 = ssub.s32 %s31, 1
        %p441 = scmp.gt.s32.totalorder %s440, 0
        %s442 = scalar_select %p441, %s440, 0
        %p443 = scmp.lt.s32.totalorder %s442, 7
        %s444 = scalar_select %p443, %s442, 7
        %s445 = smul.u32 %s444, 2
        %s446 = sadd.s32 %s445, 2
        %447 = vst [vmem:[%s426] sm:$0xff] 0.0
        %vm448 = vcmask 15360
        %449 = vst.msk [vmem:[%s426 + $0x8] sm:$0xff] %vm448, 0.0
        %450 = vst [vmem:[%s426 + $0x10] sm:$0xff] 0.0
        %451 = vst.msk [vmem:[%s426 + $0x18] sm:$0xff] %vm448, 0.0
        %p452 = scmp.ge.s32.totalorder %s31, 1
        %p453 = scmp.le.s32.totalorder %s31, 8
        %p454 = pnand %p452, %p453
        %p455 = pneg %p454
        // Predicated region
        $region57: #{tpu_custom_call.1} parent=43 // pred_check
          _
        $region58: #{tpu_custom_call.1} parent=43 // pred_check_branch
          %457 = sbr.rel (%p454) target = $region60
        $region59: #{tpu_custom_call.1} parent=43 // pred_region
          %v458 = vld [vmem:[%s370] sm:$0xff]
          %v459 = vld [vmem:[%s370 + $0x8] sm:$0xff]
          %v460 = vld [vmem:[%s379] sm:$0xff]
          %v461 = vld [vmem:[%s379 + $0x8] sm:$0xff]
          %v462 = vld [vmem:[%s388] sm:$0xff]
          %v463 = vld [vmem:[%s388 + $0x8] sm:$0xff]
          %v464 = vld [vmem:[%s3] sm:$0xff]
          %v465 = vld [vmem:[%s3 + $0x8] sm:$0xff]
          %s466 = scalar_lea.vmem %s3, 16
          %v467 = vld [vmem:[%s466] sm:$0xff]
          %v468 = vld [vmem:[%s466 + $0x8] sm:$0xff]
          %471 = vrot.lane.b32.xlu0 %v458, 127
          %v472 = vpop.permute.xlu0 %471
          %473 = vrot.lane.b32.xlu0 %v459, 127
          %v474 = vpop.permute.xlu0 %473
          %vm475 = vcmask 1039360
          %v476 = vsel %vm475, %v472, %v474
          %vm478 = vcmask 64512
          %v480 = vsel %vm478, %v467, 0
          %v483 = vsel %vm478, %v468, 0
          %485 = vmatprep.subr.mxu0 0.0
          %486 = vmatpush1.msra.mxu0 0.0
          %487 = vmatprep.subr.mxu0 0.0
          %488 = vmatpush1.msra.mxu0 0.0
          %489 = vmatprep.subr.mxu0 0.0
          %490 = vmatpush1.msra.mxu0 0.0
          %491 = vmatprep.subr.mxu0 0.0
          %492 = vmatpush1.msra.mxu0 0.0
          %493 = vmatprep.subr.mxu0 0.0
          %494 = vmatpush1.msra.mxu0 0.0
          %495 = vmatprep.subr.mxu0 0.0
          %496 = vmatpush1.msra.mxu0 0.0
          %497 = vmatprep.subr.mxu0 0.0
          %498 = vmatpush1.msra.mxu0 0.0
          %499 = vmatprep.subr.mxu0 0.0
          %500 = vmatpush1.msra.mxu0 0.0
          %501 = vmatprep.subr.mxu0 0.0
          %502 = vmatpush1.msra.mxu0 0.0
          %503 = vmatprep.subr.mxu0 0.0
          %504 = vmatpush1.msra.mxu0 0.0
          %505 = vmatprep.subr.mxu0 0.0
          %506 = vmatpush1.msra.mxu0 0.0
          %507 = vmatprep.subr.mxu0 0.0
          %508 = vmatpush1.msra.mxu0 0.0
          %509 = vmatprep.subr.mxu0 0.0
          %510 = vmatpush1.msra.mxu0 0.0
          %511 = vmatprep.subr.mxu0 0.0
          %512 = vmatpush1.msra.mxu0 0.0
          %513 = vmatprep.subr.mxu0 0.0
          %514 = vmatpush1.msra.mxu0 0.0
          %515 = vmatprep.subr.mxu0 0.0
          %516 = vmatpush1.msra.mxu0 %v476
          %517 = vmatprep.subr.mxu0 0.0
          %518 = vmatpush2.msra.mxu0 0.0
          %519 = vmatprep.subr.mxu0 0.0
          %520 = vmatpush2.msra.mxu0 0.0
          %521 = vmatprep.subr.mxu0 0.0
          %522 = vmatpush2.msra.mxu0 0.0
          %523 = vmatprep.subr.mxu0 0.0
          %524 = vmatpush2.msra.mxu0 0.0
          %525 = vmatprep.subr.mxu0 0.0
          %526 = vmatpush2.msra.mxu0 0.0
          %527 = vmatprep.subr.mxu0 0.0
          %528 = vmatpush2.msra.mxu0 0.0
          %529 = vmatprep.subr.mxu0 0.0
          %530 = vmatpush2.msra.mxu0 0.0
          %531 = vmatprep.subr.mxu0 0.0
          %532 = vmatpush2.msra.mxu0 0.0
          %533 = vmatprep.subr.mxu0 0.0
          %534 = vmatpush2.msra.mxu0 0.0
          %535 = vmatprep.subr.mxu0 0.0
          %536 = vmatpush2.msra.mxu0 0.0
          %537 = vmatprep.subr.mxu0 0.0
          %538 = vmatpush2.msra.mxu0 0.0
          %539 = vmatprep.subr.mxu0 0.0
          %540 = vmatpush2.msra.mxu0 0.0
          %541 = vmatprep.subr.mxu0 0.0
          %542 = vmatpush2.msra.mxu0 0.0
          %543 = vmatprep.subr.mxu0 0.0
          %544 = vmatpush2.msra.mxu0 0.0
          %545 = vmatprep.subr.mxu0 0.0
          %546 = vmatpush2.msra.mxu0 0.0
          %547 = vmatprep.subr.mxu0 0.0
          %548 = vmatpush2.msra.mxu0 0.0
          %549 = vmatprep.mubr.f32.mxu0 0.0
          %550 = vmatmul.mubr.f32.gmra.mxu0 %v480
          %v551 = vpop.f32.mrf.mxu0
          %v552 = vadd.f32 0.0, %v551
          %v553 = vpop.f32.mrf.mxu0
          %554 = vmatprep.mubr.f32.mxu0 0.0
          %555 = vmatmul.mubr.f32.gmra.mxu0 %v483
          %v556 = vpop.f32.mrf.mxu0
          %v557 = vadd.f32 0.0, %v556
          %v558 = vpop.f32.mrf.mxu0
          %559 = vdwg.mxu0
          %v561 = vsel %vm478, %v464, 0
          %v564 = vsel %vm478, %v465, 0
          %566 = vmatprep.subr.mxu0 0.0
          %567 = vmatpush1.msra.mxu0 0.0
          %568 = vmatprep.subr.mxu0 0.0
          %569 = vmatpush1.msra.mxu0 0.0
          %570 = vmatprep.subr.mxu0 0.0
          %571 = vmatpush1.msra.mxu0 0.0
          %572 = vmatprep.subr.mxu0 0.0
          %573 = vmatpush1.msra.mxu0 0.0
          %574 = vmatprep.subr.mxu0 0.0
          %575 = vmatpush1.msra.mxu0 0.0
          %576 = vmatprep.subr.mxu0 0.0
          %577 = vmatpush1.msra.mxu0 0.0
          %578 = vmatprep.subr.mxu0 0.0
          %579 = vmatpush1.msra.mxu0 0.0
          %580 = vmatprep.subr.mxu0 0.0
          %581 = vmatpush1.msra.mxu0 0.0
          %582 = vmatprep.subr.mxu0 0.0
          %583 = vmatpush1.msra.mxu0 0.0
          %584 = vmatprep.subr.mxu0 0.0
          %585 = vmatpush1.msra.mxu0 0.0
          %586 = vmatprep.subr.mxu0 0.0
          %587 = vmatpush1.msra.mxu0 0.0
          %588 = vmatprep.subr.mxu0 0.0
          %589 = vmatpush1.msra.mxu0 0.0
          %590 = vmatprep.subr.mxu0 0.0
          %591 = vmatpush1.msra.mxu0 0.0
          %592 = vmatprep.subr.mxu0 0.0
          %593 = vmatpush1.msra.mxu0 0.0
          %594 = vmatprep.subr.mxu0 0.0
          %595 = vmatpush1.msra.mxu0 0.0
          %596 = vmatprep.subr.mxu0 0.0
          %597 = vmatpush1.msra.mxu0 %v458
          %598 = vmatprep.subr.mxu0 0.0
          %599 = vmatpush2.msra.mxu0 0.0
          %600 = vmatprep.subr.mxu0 0.0
          %601 = vmatpush2.msra.mxu0 0.0
          %602 = vmatprep.subr.mxu0 0.0
          %603 = vmatpush2.msra.mxu0 0.0
          %604 = vmatprep.subr.mxu0 0.0
          %605 = vmatpush2.msra.mxu0 0.0
          %606 = vmatprep.subr.mxu0 0.0
          %607 = vmatpush2.msra.mxu0 0.0
          %608 = vmatprep.subr.mxu0 0.0
          %609 = vmatpush2.msra.mxu0 0.0
          %610 = vmatprep.subr.mxu0 0.0
          %611 = vmatpush2.msra.mxu0 0.0
          %612 = vmatprep.subr.mxu0 0.0
          %613 = vmatpush2.msra.mxu0 0.0
          %614 = vmatprep.subr.mxu0 0.0
          %615 = vmatpush2.msra.mxu0 0.0
          %616 = vmatprep.subr.mxu0 0.0
          %617 = vmatpush2.msra.mxu0 0.0
          %618 = vmatprep.subr.mxu0 0.0
          %619 = vmatpush2.msra.mxu0 0.0
          %620 = vmatprep.subr.mxu0 0.0
          %621 = vmatpush2.msra.mxu0 0.0
          %622 = vmatprep.subr.mxu0 0.0
          %623 = vmatpush2.msra.mxu0 0.0
          %624 = vmatprep.subr.mxu0 0.0
          %625 = vmatpush2.msra.mxu0 0.0
          %626 = vmatprep.subr.mxu0 0.0
          %627 = vmatpush2.msra.mxu0 0.0
          %628 = vmatprep.subr.mxu0 0.0
          %629 = vmatpush2.msra.mxu0 0.0
          %630 = vmatprep.mubr.f32.mxu0 0.0
          %631 = vmatmul.mubr.f32.gmra.mxu0 %v561
          %v632 = vpop.f32.mrf.mxu0
          %v633 = vadd.f32 %v552, %v632
          %v634 = vpop.f32.mrf.mxu0
          %635 = vmatprep.mubr.f32.mxu0 0.0
          %636 = vmatmul.mubr.f32.gmra.mxu0 %v564
          %v637 = vpop.f32.mrf.mxu0
          %v638 = vadd.f32 %v557, %v637
          %v639 = vpop.f32.mrf.mxu0
          %640 = vdwg.mxu0
          %s641 = scalar_lea.vmem %s3, 32
          %v642 = vld [vmem:[%s641] sm:$0xff]
          %v643 = vld [vmem:[%s641 + $0x8] sm:$0xff]
          %644 = vrot.lane.b32.xlu0 %v458, 126
          %v645 = vpop.permute.xlu0 %644
          %646 = vrot.lane.b32.xlu0 %v459, 126
          %v647 = vpop.permute.xlu0 %646
          %vm648 = vcmask 1031168
          %v649 = vsel %vm648, %v645, %v647
          %v652 = vsel %vm478, %v642, 0
          %v655 = vsel %vm478, %v643, 0
          %657 = vmatprep.subr.mxu0 0.0
          %658 = vmatpush1.msra.mxu0 0.0
          %659 = vmatprep.subr.mxu0 0.0
          %660 = vmatpush1.msra.mxu0 0.0
          %661 = vmatprep.subr.mxu0 0.0
          %662 = vmatpush1.msra.mxu0 0.0
          %663 = vmatprep.subr.mxu0 0.0
          %664 = vmatpush1.msra.mxu0 0.0
          %665 = vmatprep.subr.mxu0 0.0
          %666 = vmatpush1.msra.mxu0 0.0
          %667 = vmatprep.subr.mxu0 0.0
          %668 = vmatpush1.msra.mxu0 0.0
          %669 = vmatprep.subr.mxu0 0.0
          %670 = vmatpush1.msra.mxu0 0.0
          %671 = vmatprep.subr.mxu0 0.0
          %672 = vmatpush1.msra.mxu0 0.0
          %673 = vmatprep.subr.mxu0 0.0
          %674 = vmatpush1.msra.mxu0 0.0
          %675 = vmatprep.subr.mxu0 0.0
          %676 = vmatpush1.msra.mxu0 0.0
          %677 = vmatprep.subr.mxu0 0.0
          %678 = vmatpush1.msra.mxu0 0.0
          %679 = vmatprep.subr.mxu0 0.0
          %680 = vmatpush1.msra.mxu0 0.0
          %681 = vmatprep.subr.mxu0 0.0
          %682 = vmatpush1.msra.mxu0 0.0
          %683 = vmatprep.subr.mxu0 0.0
          %684 = vmatpush1.msra.mxu0 0.0
          %685 = vmatprep.subr.mxu0 0.0
          %686 = vmatpush1.msra.mxu0 0.0
          %687 = vmatprep.subr.mxu0 0.0
          %688 = vmatpush1.msra.mxu0 %v649
          %689 = vmatprep.subr.mxu0 0.0
          %690 = vmatpush2.msra.mxu0 0.0
          %691 = vmatprep.subr.mxu0 0.0
          %692 = vmatpush2.msra.mxu0 0.0
          %693 = vmatprep.subr.mxu0 0.0
          %694 = vmatpush2.msra.mxu0 0.0
          %695 = vmatprep.subr.mxu0 0.0
          %696 = vmatpush2.msra.mxu0 0.0
          %697 = vmatprep.subr.mxu0 0.0
          %698 = vmatpush2.msra.mxu0 0.0
          %699 = vmatprep.subr.mxu0 0.0
          %700 = vmatpush2.msra.mxu0 0.0
          %701 = vmatprep.subr.mxu0 0.0
          %702 = vmatpush2.msra.mxu0 0.0
          %703 = vmatprep.subr.mxu0 0.0
          %704 = vmatpush2.msra.mxu0 0.0
          %705 = vmatprep.subr.mxu0 0.0
          %706 = vmatpush2.msra.mxu0 0.0
          %707 = vmatprep.subr.mxu0 0.0
          %708 = vmatpush2.msra.mxu0 0.0
          %709 = vmatprep.subr.mxu0 0.0
          %710 = vmatpush2.msra.mxu0 0.0
          %711 = vmatprep.subr.mxu0 0.0
          %712 = vmatpush2.msra.mxu0 0.0
          %713 = vmatprep.subr.mxu0 0.0
          %714 = vmatpush2.msra.mxu0 0.0
          %715 = vmatprep.subr.mxu0 0.0
          %716 = vmatpush2.msra.mxu0 0.0
          %717 = vmatprep.subr.mxu0 0.0
          %718 = vmatpush2.msra.mxu0 0.0
          %719 = vmatprep.subr.mxu0 0.0
          %720 = vmatpush2.msra.mxu0 0.0
          %721 = vmatprep.mubr.f32.mxu0 0.0
          %722 = vmatmul.mubr.f32.gmra.mxu0 %v652
          %v723 = vpop.f32.mrf.mxu0
          %v724 = vadd.f32 0.0, %v723
          %v725 = vpop.f32.mrf.mxu0
          %726 = vmatprep.mubr.f32.mxu0 0.0
          %727 = vmatmul.mubr.f32.gmra.mxu0 %v655
          %v728 = vpop.f32.mrf.mxu0
          %v729 = vadd.f32 0.0, %v728
          %v730 = vpop.f32.mrf.mxu0
          %731 = vdwg.mxu0
          %v732 = vadd.f32 %v633, %v724
          %v733 = vadd.f32 %v638, %v729
          %s734 = scalar_lea.vmem %s3, 48
          %v735 = vld [vmem:[%s734] sm:$0xff]
          %v736 = vld [vmem:[%s734 + $0x8] sm:$0xff]
          %v738 = vsel %vm478, %v735, 0
          %v741 = vsel %vm478, %v736, 0
          %743 = vmatprep.subr.mxu0 0.0
          %744 = vmatpush1.msra.mxu0 0.0
          %745 = vmatprep.subr.mxu0 0.0
          %746 = vmatpush1.msra.mxu0 0.0
          %747 = vmatprep.subr.mxu0 0.0
          %748 = vmatpush1.msra.mxu0 0.0
          %749 = vmatprep.subr.mxu0 0.0
          %750 = vmatpush1.msra.mxu0 0.0
          %751 = vmatprep.subr.mxu0 0.0
          %752 = vmatpush1.msra.mxu0 0.0
          %753 = vmatprep.subr.mxu0 0.0
          %754 = vmatpush1.msra.mxu0 0.0
          %755 = vmatprep.subr.mxu0 0.0
          %756 = vmatpush1.msra.mxu0 0.0
          %757 = vmatprep.subr.mxu0 0.0
          %758 = vmatpush1.msra.mxu0 0.0
          %759 = vmatprep.subr.mxu0 0.0
          %760 = vmatpush1.msra.mxu0 0.0
          %761 = vmatprep.subr.mxu0 0.0
          %762 = vmatpush1.msra.mxu0 0.0
          %763 = vmatprep.subr.mxu0 0.0
          %764 = vmatpush1.msra.mxu0 0.0
          %765 = vmatprep.subr.mxu0 0.0
          %766 = vmatpush1.msra.mxu0 0.0
          %767 = vmatprep.subr.mxu0 0.0
          %768 = vmatpush1.msra.mxu0 0.0
          %769 = vmatprep.subr.mxu0 0.0
          %770 = vmatpush1.msra.mxu0 0.0
          %771 = vmatprep.subr.mxu0 0.0
          %772 = vmatpush1.msra.mxu0 0.0
          %773 = vmatprep.subr.mxu0 0.0
          %774 = vmatpush1.msra.mxu0 %v460
          %775 = vmatprep.subr.mxu0 0.0
          %776 = vmatpush2.msra.mxu0 0.0
          %777 = vmatprep.subr.mxu0 0.0
          %778 = vmatpush2.msra.mxu0 0.0
          %779 = vmatprep.subr.mxu0 0.0
          %780 = vmatpush2.msra.mxu0 0.0
          %781 = vmatprep.subr.mxu0 0.0
          %782 = vmatpush2.msra.mxu0 0.0
          %783 = vmatprep.subr.mxu0 0.0
          %784 = vmatpush2.msra.mxu0 0.0
          %785 = vmatprep.subr.mxu0 0.0
          %786 = vmatpush2.msra.mxu0 0.0
          %787 = vmatprep.subr.mxu0 0.0
          %788 = vmatpush2.msra.mxu0 0.0
          %789 = vmatprep.subr.mxu0 0.0
          %790 = vmatpush2.msra.mxu0 0.0
          %791 = vmatprep.subr.mxu0 0.0
          %792 = vmatpush2.msra.mxu0 0.0
          %793 = vmatprep.subr.mxu0 0.0
          %794 = vmatpush2.msra.mxu0 0.0
          %795 = vmatprep.subr.mxu0 0.0
          %796 = vmatpush2.msra.mxu0 0.0
          %797 = vmatprep.subr.mxu0 0.0
          %798 = vmatpush2.msra.mxu0 0.0
          %799 = vmatprep.subr.mxu0 0.0
          %800 = vmatpush2.msra.mxu0 0.0
          %801 = vmatprep.subr.mxu0 0.0
          %802 = vmatpush2.msra.mxu0 0.0
          %803 = vmatprep.subr.mxu0 0.0
          %804 = vmatpush2.msra.mxu0 0.0
          %805 = vmatprep.subr.mxu0 0.0
          %806 = vmatpush2.msra.mxu0 0.0
          %807 = vmatprep.mubr.f32.mxu0 0.0
          %808 = vmatmul.mubr.f32.gmra.mxu0 %v738
          %v809 = vpop.f32.mrf.mxu0
          %v810 = vadd.f32 0.0, %v809
          %v811 = vpop.f32.mrf.mxu0
          %812 = vmatprep.mubr.f32.mxu0 0.0
          %813 = vmatmul.mubr.f32.gmra.mxu0 %v741
          %v814 = vpop.f32.mrf.mxu0
          %v815 = vadd.f32 0.0, %v814
          %v816 = vpop.f32.mrf.mxu0
          %817 = vdwg.mxu0
          %v818 = vadd.f32 %v732, %v810
          %v819 = vadd.f32 %v733, %v815
          %s820 = scalar_lea.vmem %s3, 64
          %v821 = vld [vmem:[%s820] sm:$0xff]
          %v822 = vld [vmem:[%s820 + $0x8] sm:$0xff]
          %825 = vrot.lane.b32.xlu0 %v460, 127
          %v826 = vpop.permute.xlu0 %825
          %827 = vrot.lane.b32.xlu0 %v461, 127
          %v828 = vpop.permute.xlu0 %827
          %v829 = vsel %vm475, %v826, %v828
          %v832 = vsel %vm478, %v821, 0
          %v835 = vsel %vm478, %v822, 0
          %837 = vmatprep.subr.mxu0 0.0
          %838 = vmatpush1.msra.mxu0 0.0
          %839 = vmatprep.subr.mxu0 0.0
          %840 = vmatpush1.msra.mxu0 0.0
          %841 = vmatprep.subr.mxu0 0.0
          %842 = vmatpush1.msra.mxu0 0.0
          %843 = vmatprep.subr.mxu0 0.0
          %844 = vmatpush1.msra.mxu0 0.0
          %845 = vmatprep.subr.mxu0 0.0
          %846 = vmatpush1.msra.mxu0 0.0
          %847 = vmatprep.subr.mxu0 0.0
          %848 = vmatpush1.msra.mxu0 0.0
          %849 = vmatprep.subr.mxu0 0.0
          %850 = vmatpush1.msra.mxu0 0.0
          %851 = vmatprep.subr.mxu0 0.0
          %852 = vmatpush1.msra.mxu0 0.0
          %853 = vmatprep.subr.mxu0 0.0
          %854 = vmatpush1.msra.mxu0 0.0
          %855 = vmatprep.subr.mxu0 0.0
          %856 = vmatpush1.msra.mxu0 0.0
          %857 = vmatprep.subr.mxu0 0.0
          %858 = vmatpush1.msra.mxu0 0.0
          %859 = vmatprep.subr.mxu0 0.0
          %860 = vmatpush1.msra.mxu0 0.0
          %861 = vmatprep.subr.mxu0 0.0
          %862 = vmatpush1.msra.mxu0 0.0
          %863 = vmatprep.subr.mxu0 0.0
          %864 = vmatpush1.msra.mxu0 0.0
          %865 = vmatprep.subr.mxu0 0.0
          %866 = vmatpush1.msra.mxu0 0.0
          %867 = vmatprep.subr.mxu0 0.0
          %868 = vmatpush1.msra.mxu0 %v829
          %869 = vmatprep.subr.mxu0 0.0
          %870 = vmatpush2.msra.mxu0 0.0
          %871 = vmatprep.subr.mxu0 0.0
          %872 = vmatpush2.msra.mxu0 0.0
          %873 = vmatprep.subr.mxu0 0.0
          %874 = vmatpush2.msra.mxu0 0.0
          %875 = vmatprep.subr.mxu0 0.0
          %876 = vmatpush2.msra.mxu0 0.0
          %877 = vmatprep.subr.mxu0 0.0
          %878 = vmatpush2.msra.mxu0 0.0
          %879 = vmatprep.subr.mxu0 0.0
          %880 = vmatpush2.msra.mxu0 0.0
          %881 = vmatprep.subr.mxu0 0.0
          %882 = vmatpush2.msra.mxu0 0.0
          %883 = vmatprep.subr.mxu0 0.0
          %884 = vmatpush2.msra.mxu0 0.0
          %885 = vmatprep.subr.mxu0 0.0
          %886 = vmatpush2.msra.mxu0 0.0
          %887 = vmatprep.subr.mxu0 0.0
          %888 = vmatpush2.msra.mxu0 0.0
          %889 = vmatprep.subr.mxu0 0.0
          %890 = vmatpush2.msra.mxu0 0.0
          %891 = vmatprep.subr.mxu0 0.0
          %892 = vmatpush2.msra.mxu0 0.0
          %893 = vmatprep.subr.mxu0 0.0
          %894 = vmatpush2.msra.mxu0 0.0
          %895 = vmatprep.subr.mxu0 0.0
          %896 = vmatpush2.msra.mxu0 0.0
          %897 = vmatprep.subr.mxu0 0.0
          %898 = vmatpush2.msra.mxu0 0.0
          %899 = vmatprep.subr.mxu0 0.0
          %900 = vmatpush2.msra.mxu0 0.0
          %901 = vmatprep.mubr.f32.mxu0 0.0
          %902 = vmatmul.mubr.f32.gmra.mxu0 %v832
          %v903 = vpop.f32.mrf.mxu0
          %v904 = vadd.f32 0.0, %v903
          %v905 = vpop.f32.mrf.mxu0
          %906 = vmatprep.mubr.f32.mxu0 0.0
          %907 = vmatmul.mubr.f32.gmra.mxu0 %v835
          %v908 = vpop.f32.mrf.mxu0
          %v909 = vadd.f32 0.0, %v908
          %v910 = vpop.f32.mrf.mxu0
          %911 = vdwg.mxu0
          %v912 = vadd.f32 %v818, %v904
          %v913 = vadd.f32 %v819, %v909
          %s914 = scalar_lea.vmem %s3, 80
          %v915 = vld [vmem:[%s914] sm:$0xff]
          %v916 = vld [vmem:[%s914 + $0x8] sm:$0xff]
          %917 = vrot.lane.b32.xlu0 %v460, 126
          %v918 = vpop.permute.xlu0 %917
          %919 = vrot.lane.b32.xlu0 %v461, 126
          %v920 = vpop.permute.xlu0 %919
          %v921 = vsel %vm648, %v918, %v920
          %v924 = vsel %vm478, %v915, 0
          %v927 = vsel %vm478, %v916, 0
          %929 = vmatprep.subr.mxu0 0.0
          %930 = vmatpush1.msra.mxu0 0.0
          %931 = vmatprep.subr.mxu0 0.0
          %932 = vmatpush1.msra.mxu0 0.0
          %933 = vmatprep.subr.mxu0 0.0
          %934 = vmatpush1.msra.mxu0 0.0
          %935 = vmatprep.subr.mxu0 0.0
          %936 = vmatpush1.msra.mxu0 0.0
          %937 = vmatprep.subr.mxu0 0.0
          %938 = vmatpush1.msra.mxu0 0.0
          %939 = vmatprep.subr.mxu0 0.0
          %940 = vmatpush1.msra.mxu0 0.0
          %941 = vmatprep.subr.mxu0 0.0
          %942 = vmatpush1.msra.mxu0 0.0
          %943 = vmatprep.subr.mxu0 0.0
          %944 = vmatpush1.msra.mxu0 0.0
          %945 = vmatprep.subr.mxu0 0.0
          %946 = vmatpush1.msra.mxu0 0.0
          %947 = vmatprep.subr.mxu0 0.0
          %948 = vmatpush1.msra.mxu0 0.0
          %949 = vmatprep.subr.mxu0 0.0
          %950 = vmatpush1.msra.mxu0 0.0
          %951 = vmatprep.subr.mxu0 0.0
          %952 = vmatpush1.msra.mxu0 0.0
          %953 = vmatprep.subr.mxu0 0.0
          %954 = vmatpush1.msra.mxu0 0.0
          %955 = vmatprep.subr.mxu0 0.0
          %956 = vmatpush1.msra.mxu0 0.0
          %957 = vmatprep.subr.mxu0 0.0
          %958 = vmatpush1.msra.mxu0 0.0
          %959 = vmatprep.subr.mxu0 0.0
          %960 = vmatpush1.msra.mxu0 %v921
          %961 = vmatprep.subr.mxu0 0.0
          %962 = vmatpush2.msra.mxu0 0.0
          %963 = vmatprep.subr.mxu0 0.0
          %964 = vmatpush2.msra.mxu0 0.0
          %965 = vmatprep.subr.mxu0 0.0
          %966 = vmatpush2.msra.mxu0 0.0
          %967 = vmatprep.subr.mxu0 0.0
          %968 = vmatpush2.msra.mxu0 0.0
          %969 = vmatprep.subr.mxu0 0.0
          %970 = vmatpush2.msra.mxu0 0.0
          %971 = vmatprep.subr.mxu0 0.0
          %972 = vmatpush2.msra.mxu0 0.0
          %973 = vmatprep.subr.mxu0 0.0
          %974 = vmatpush2.msra.mxu0 0.0
          %975 = vmatprep.subr.mxu0 0.0
          %976 = vmatpush2.msra.mxu0 0.0
          %977 = vmatprep.subr.mxu0 0.0
          %978 = vmatpush2.msra.mxu0 0.0
          %979 = vmatprep.subr.mxu0 0.0
          %980 = vmatpush2.msra.mxu0 0.0
          %981 = vmatprep.subr.mxu0 0.0
          %982 = vmatpush2.msra.mxu0 0.0
          %983 = vmatprep.subr.mxu0 0.0
          %984 = vmatpush2.msra.mxu0 0.0
          %985 = vmatprep.subr.mxu0 0.0
          %986 = vmatpush2.msra.mxu0 0.0
          %987 = vmatprep.subr.mxu0 0.0
          %988 = vmatpush2.msra.mxu0 0.0
          %989 = vmatprep.subr.mxu0 0.0
          %990 = vmatpush2.msra.mxu0 0.0
          %991 = vmatprep.subr.mxu0 0.0
          %992 = vmatpush2.msra.mxu0 0.0
          %993 = vmatprep.mubr.f32.mxu0 0.0
          %994 = vmatmul.mubr.f32.gmra.mxu0 %v924
          %v995 = vpop.f32.mrf.mxu0
          %v996 = vadd.f32 0.0, %v995
          %v997 = vpop.f32.mrf.mxu0
          %998 = vmatprep.mubr.f32.mxu0 0.0
          %999 = vmatmul.mubr.f32.gmra.mxu0 %v927
          %v1000 = vpop.f32.mrf.mxu0
          %v1001 = vadd.f32 0.0, %v1000
          %v1002 = vpop.f32.mrf.mxu0
          %1003 = vdwg.mxu0
          %v1004 = vadd.f32 %v912, %v996
          %v1005 = vadd.f32 %v913, %v1001
          %s1006 = scalar_lea.vmem %s3, 96
          %v1007 = vld [vmem:[%s1006] sm:$0xff]
          %v1008 = vld [vmem:[%s1006 + $0x8] sm:$0xff]
          %v1010 = vsel %vm478, %v1007, 0
          %v1013 = vsel %vm478, %v1008, 0
          %1015 = vmatprep.subr.mxu0 0.0
          %1016 = vmatpush1.msra.mxu0 0.0
          %1017 = vmatprep.subr.mxu0 0.0
          %1018 = vmatpush1.msra.mxu0 0.0
          %1019 = vmatprep.subr.mxu0 0.0
          %1020 = vmatpush1.msra.mxu0 0.0
          %1021 = vmatprep.subr.mxu0 0.0
          %1022 = vmatpush1.msra.mxu0 0.0
          %1023 = vmatprep.subr.mxu0 0.0
          %1024 = vmatpush1.msra.mxu0 0.0
          %1025 = vmatprep.subr.mxu0 0.0
          %1026 = vmatpush1.msra.mxu0 0.0
          %1027 = vmatprep.subr.mxu0 0.0
          %1028 = vmatpush1.msra.mxu0 0.0
          %1029 = vmatprep.subr.mxu0 0.0
          %1030 = vmatpush1.msra.mxu0 0.0
          %1031 = vmatprep.subr.mxu0 0.0
          %1032 = vmatpush1.msra.mxu0 0.0
          %1033 = vmatprep.subr.mxu0 0.0
          %1034 = vmatpush1.msra.mxu0 0.0
          %1035 = vmatprep.subr.mxu0 0.0
          %1036 = vmatpush1.msra.mxu0 0.0
          %1037 = vmatprep.subr.mxu0 0.0
          %1038 = vmatpush1.msra.mxu0 0.0
          %1039 = vmatprep.subr.mxu0 0.0
          %1040 = vmatpush1.msra.mxu0 0.0
          %1041 = vmatprep.subr.mxu0 0.0
          %1042 = vmatpush1.msra.mxu0 0.0
          %1043 = vmatprep.subr.mxu0 0.0
          %1044 = vmatpush1.msra.mxu0 0.0
          %1045 = vmatprep.subr.mxu0 0.0
          %1046 = vmatpush1.msra.mxu0 %v462
          %1047 = vmatprep.subr.mxu0 0.0
          %1048 = vmatpush2.msra.mxu0 0.0
          %1049 = vmatprep.subr.mxu0 0.0
          %1050 = vmatpush2.msra.mxu0 0.0
          %1051 = vmatprep.subr.mxu0 0.0
          %1052 = vmatpush2.msra.mxu0 0.0
          %1053 = vmatprep.subr.mxu0 0.0
          %1054 = vmatpush2.msra.mxu0 0.0
          %1055 = vmatprep.subr.mxu0 0.0
          %1056 = vmatpush2.msra.mxu0 0.0
          %1057 = vmatprep.subr.mxu0 0.0
          %1058 = vmatpush2.msra.mxu0 0.0
          %1059 = vmatprep.subr.mxu0 0.0
          %1060 = vmatpush2.msra.mxu0 0.0
          %1061 = vmatprep.subr.mxu0 0.0
          %1062 = vmatpush2.msra.mxu0 0.0
          %1063 = vmatprep.subr.mxu0 0.0
          %1064 = vmatpush2.msra.mxu0 0.0
          %1065 = vmatprep.subr.mxu0 0.0
          %1066 = vmatpush2.msra.mxu0 0.0
          %1067 = vmatprep.subr.mxu0 0.0
          %1068 = vmatpush2.msra.mxu0 0.0
          %1069 = vmatprep.subr.mxu0 0.0
          %1070 = vmatpush2.msra.mxu0 0.0
          %1071 = vmatprep.subr.mxu0 0.0
          %1072 = vmatpush2.msra.mxu0 0.0
          %1073 = vmatprep.subr.mxu0 0.0
          %1074 = vmatpush2.msra.mxu0 0.0
          %1075 = vmatprep.subr.mxu0 0.0
          %1076 = vmatpush2.msra.mxu0 0.0
          %1077 = vmatprep.subr.mxu0 0.0
          %1078 = vmatpush2.msra.mxu0 0.0
          %1079 = vmatprep.mubr.f32.mxu0 0.0
          %1080 = vmatmul.mubr.f32.gmra.mxu0 %v1010
          %v1081 = vpop.f32.mrf.mxu0
          %v1082 = vadd.f32 0.0, %v1081
          %v1083 = vpop.f32.mrf.mxu0
          %1084 = vmatprep.mubr.f32.mxu0 0.0
          %1085 = vmatmul.mubr.f32.gmra.mxu0 %v1013
          %v1086 = vpop.f32.mrf.mxu0
          %v1087 = vadd.f32 0.0, %v1086
          %v1088 = vpop.f32.mrf.mxu0
          %1089 = vdwg.mxu0
          %v1090 = vadd.f32 %v1004, %v1082
          %v1091 = vadd.f32 %v1005, %v1087
          %s1092 = scalar_lea.vmem %s3, 112
          %v1093 = vld [vmem:[%s1092] sm:$0xff]
          %v1094 = vld [vmem:[%s1092 + $0x8] sm:$0xff]
          %1097 = vrot.lane.b32.xlu0 %v462, 127
          %v1098 = vpop.permute.xlu0 %1097
          %1099 = vrot.lane.b32.xlu0 %v463, 127
          %v1100 = vpop.permute.xlu0 %1099
          %v1101 = vsel %vm475, %v1098, %v1100
          %v1104 = vsel %vm478, %v1093, 0
          %v1107 = vsel %vm478, %v1094, 0
          %1109 = vmatprep.subr.mxu0 0.0
          %1110 = vmatpush1.msra.mxu0 0.0
          %1111 = vmatprep.subr.mxu0 0.0
          %1112 = vmatpush1.msra.mxu0 0.0
          %1113 = vmatprep.subr.mxu0 0.0
          %1114 = vmatpush1.msra.mxu0 0.0
          %1115 = vmatprep.subr.mxu0 0.0
          %1116 = vmatpush1.msra.mxu0 0.0
          %1117 = vmatprep.subr.mxu0 0.0
          %1118 = vmatpush1.msra.mxu0 0.0
          %1119 = vmatprep.subr.mxu0 0.0
          %1120 = vmatpush1.msra.mxu0 0.0
          %1121 = vmatprep.subr.mxu0 0.0
          %1122 = vmatpush1.msra.mxu0 0.0
          %1123 = vmatprep.subr.mxu0 0.0
          %1124 = vmatpush1.msra.mxu0 0.0
          %1125 = vmatprep.subr.mxu0 0.0
          %1126 = vmatpush1.msra.mxu0 0.0
          %1127 = vmatprep.subr.mxu0 0.0
          %1128 = vmatpush1.msra.mxu0 0.0
          %1129 = vmatprep.subr.mxu0 0.0
          %1130 = vmatpush1.msra.mxu0 0.0
          %1131 = vmatprep.subr.mxu0 0.0
          %1132 = vmatpush1.msra.mxu0 0.0
          %1133 = vmatprep.subr.mxu0 0.0
          %1134 = vmatpush1.msra.mxu0 0.0
          %1135 = vmatprep.subr.mxu0 0.0
          %1136 = vmatpush1.msra.mxu0 0.0
          %1137 = vmatprep.subr.mxu0 0.0
          %1138 = vmatpush1.msra.mxu0 0.0
          %1139 = vmatprep.subr.mxu0 0.0
          %1140 = vmatpush1.msra.mxu0 %v1101
          %1141 = vmatprep.subr.mxu0 0.0
          %1142 = vmatpush2.msra.mxu0 0.0
          %1143 = vmatprep.subr.mxu0 0.0
          %1144 = vmatpush2.msra.mxu0 0.0
          %1145 = vmatprep.subr.mxu0 0.0
          %1146 = vmatpush2.msra.mxu0 0.0
          %1147 = vmatprep.subr.mxu0 0.0
          %1148 = vmatpush2.msra.mxu0 0.0
          %1149 = vmatprep.subr.mxu0 0.0
          %1150 = vmatpush2.msra.mxu0 0.0
          %1151 = vmatprep.subr.mxu0 0.0
          %1152 = vmatpush2.msra.mxu0 0.0
          %1153 = vmatprep.subr.mxu0 0.0
          %1154 = vmatpush2.msra.mxu0 0.0
          %1155 = vmatprep.subr.mxu0 0.0
          %1156 = vmatpush2.msra.mxu0 0.0
          %1157 = vmatprep.subr.mxu0 0.0
          %1158 = vmatpush2.msra.mxu0 0.0
          %1159 = vmatprep.subr.mxu0 0.0
          %1160 = vmatpush2.msra.mxu0 0.0
          %1161 = vmatprep.subr.mxu0 0.0
          %1162 = vmatpush2.msra.mxu0 0.0
          %1163 = vmatprep.subr.mxu0 0.0
          %1164 = vmatpush2.msra.mxu0 0.0
          %1165 = vmatprep.subr.mxu0 0.0
          %1166 = vmatpush2.msra.mxu0 0.0
          %1167 = vmatprep.subr.mxu0 0.0
          %1168 = vmatpush2.msra.mxu0 0.0
          %1169 = vmatprep.subr.mxu0 0.0
          %1170 = vmatpush2.msra.mxu0 0.0
          %1171 = vmatprep.subr.mxu0 0.0
          %1172 = vmatpush2.msra.mxu0 0.0
          %1173 = vmatprep.mubr.f32.mxu0 0.0
          %1174 = vmatmul.mubr.f32.gmra.mxu0 %v1104
          %v1175 = vpop.f32.mrf.mxu0
          %v1176 = vadd.f32 0.0, %v1175
          %v1177 = vpop.f32.mrf.mxu0
          %1178 = vmatprep.mubr.f32.mxu0 0.0
          %1179 = vmatmul.mubr.f32.gmra.mxu0 %v1107
          %v1180 = vpop.f32.mrf.mxu0
          %v1181 = vadd.f32 0.0, %v1180
          %v1182 = vpop.f32.mrf.mxu0
          %1183 = vdwg.mxu0
          %v1184 = vadd.f32 %v1090, %v1176
          %v1185 = vadd.f32 %v1091, %v1181
          %s1186 = scalar_lea.vmem %s3, 128
          %v1187 = vld [vmem:[%s1186] sm:$0xff]
          %v1188 = vld [vmem:[%s1186 + $0x8] sm:$0xff]
          %1189 = vrot.lane.b32.xlu0 %v462, 126
          %v1190 = vpop.permute.xlu0 %1189
          %1191 = vrot.lane.b32.xlu0 %v463, 126
          %v1192 = vpop.permute.xlu0 %1191
          %v1193 = vsel %vm648, %v1190, %v1192
          %v1196 = vsel %vm478, %v1187, 0
          %v1199 = vsel %vm478, %v1188, 0
          %1201 = vmatprep.subr.mxu0 0.0
          %1202 = vmatpush1.msra.mxu0 0.0
          %1203 = vmatprep.subr.mxu0 0.0
          %1204 = vmatpush1.msra.mxu0 0.0
          %1205 = vmatprep.subr.mxu0 0.0
          %1206 = vmatpush1.msra.mxu0 0.0
          %1207 = vmatprep.subr.mxu0 0.0
          %1208 = vmatpush1.msra.mxu0 0.0
          %1209 = vmatprep.subr.mxu0 0.0
          %1210 = vmatpush1.msra.mxu0 0.0
          %1211 = vmatprep.subr.mxu0 0.0
          %1212 = vmatpush1.msra.mxu0 0.0
          %1213 = vmatprep.subr.mxu0 0.0
          %1214 = vmatpush1.msra.mxu0 0.0
          %1215 = vmatprep.subr.mxu0 0.0
          %1216 = vmatpush1.msra.mxu0 0.0
          %1217 = vmatprep.subr.mxu0 0.0
          %1218 = vmatpush1.msra.mxu0 0.0
          %1219 = vmatprep.subr.mxu0 0.0
          %1220 = vmatpush1.msra.mxu0 0.0
          %1221 = vmatprep.subr.mxu0 0.0
          %1222 = vmatpush1.msra.mxu0 0.0
          %1223 = vmatprep.subr.mxu0 0.0
          %1224 = vmatpush1.msra.mxu0 0.0
          %1225 = vmatprep.subr.mxu0 0.0
          %1226 = vmatpush1.msra.mxu0 0.0
          %1227 = vmatprep.subr.mxu0 0.0
          %1228 = vmatpush1.msra.mxu0 0.0
          %1229 = vmatprep.subr.mxu0 0.0
          %1230 = vmatpush1.msra.mxu0 0.0
          %1231 = vmatprep.subr.mxu0 0.0
          %1232 = vmatpush1.msra.mxu0 %v1193
          %1233 = vmatprep.subr.mxu0 0.0
          %1234 = vmatpush2.msra.mxu0 0.0
          %1235 = vmatprep.subr.mxu0 0.0
          %1236 = vmatpush2.msra.mxu0 0.0
          %1237 = vmatprep.subr.mxu0 0.0
          %1238 = vmatpush2.msra.mxu0 0.0
          %1239 = vmatprep.subr.mxu0 0.0
          %1240 = vmatpush2.msra.mxu0 0.0
          %1241 = vmatprep.subr.mxu0 0.0
          %1242 = vmatpush2.msra.mxu0 0.0
          %1243 = vmatprep.subr.mxu0 0.0
          %1244 = vmatpush2.msra.mxu0 0.0
          %1245 = vmatprep.subr.mxu0 0.0
          %1246 = vmatpush2.msra.mxu0 0.0
          %1247 = vmatprep.subr.mxu0 0.0
          %1248 = vmatpush2.msra.mxu0 0.0
          %1249 = vmatprep.subr.mxu0 0.0
          %1250 = vmatpush2.msra.mxu0 0.0
          %1251 = vmatprep.subr.mxu0 0.0
          %1252 = vmatpush2.msra.mxu0 0.0
          %1253 = vmatprep.subr.mxu0 0.0
          %1254 = vmatpush2.msra.mxu0 0.0
          %1255 = vmatprep.subr.mxu0 0.0
          %1256 = vmatpush2.msra.mxu0 0.0
          %1257 = vmatprep.subr.mxu0 0.0
          %1258 = vmatpush2.msra.mxu0 0.0
          %1259 = vmatprep.subr.mxu0 0.0
          %1260 = vmatpush2.msra.mxu0 0.0
          %1261 = vmatprep.subr.mxu0 0.0
          %1262 = vmatpush2.msra.mxu0 0.0
          %1263 = vmatprep.subr.mxu0 0.0
          %1264 = vmatpush2.msra.mxu0 0.0
          %1265 = vmatprep.mubr.f32.mxu0 0.0
          %1266 = vmatmul.mubr.f32.gmra.mxu0 %v1196
          %v1267 = vpop.f32.mrf.mxu0
          %v1268 = vadd.f32 0.0, %v1267
          %v1269 = vpop.f32.mrf.mxu0
          %1270 = vmatprep.mubr.f32.mxu0 0.0
          %1271 = vmatmul.mubr.f32.gmra.mxu0 %v1199
          %v1272 = vpop.f32.mrf.mxu0
          %v1273 = vadd.f32 0.0, %v1272
          %v1274 = vpop.f32.mrf.mxu0
          %1275 = vdwg.mxu0
          %v1276 = vadd.f32 %v1184, %v1268
          %v1277 = vadd.f32 %v1185, %v1273
          %v1278 = vld [vmem:[%s4] sm:$0xff]
          %v1279 = vld [vmem:[%s4 + $0x8] sm:$0xff]
          %1281 = vset.pattern.permute.xlu0 0
          %1282 = vperm.xlu0 %1281, %v1278
          %v1283 = vpop.permute.xlu0 %1282
          %1286 = vset.pattern.permute.xlu0 0
          %1287 = vperm.xlu0 %1286, %v1279
          %v1288 = vpop.permute.xlu0 %1287
          %v1290 = vmul.f32 %v1276, %v1283
          %v1291 = vmul.f32 %v1277, %v1288
          %v1292 = vld [vmem:[%s5] sm:$0xff]
          %v1293 = vld [vmem:[%s5 + $0x8] sm:$0xff]
          %1295 = vset.pattern.permute.xlu0 0
          %1296 = vperm.xlu0 %1295, %v1292
          %v1297 = vpop.permute.xlu0 %1296
          %1300 = vset.pattern.permute.xlu0 0
          %1301 = vperm.xlu0 %1300, %v1293
          %v1302 = vpop.permute.xlu0 %1301
          %v1304 = vadd.f32 %v1290, %v1297
          %v1305 = vadd.f32 %v1291, %v1302
          %v1306 = vmax.f32 %v1304, 0.0
          %v1307 = vmax.f32 %v1305, 0.0
          %1310 = vrot.lane.b32.xlu0 %v1306, 1
          %v1311 = vpop.permute.xlu0 %1310
          %1312 = vrot.lane.b32.xlu0 %v1307, 1
          %v1313 = vpop.permute.xlu0 %1312
          %vm1316 = vcmask 1047560
          %1317 = vst.msk [vmem:[%s426] sm:$0xff] %vm1316, %v1311
          %vm1318 = vcmask 7168
          %1319 = vst.msk [vmem:[%s426 + $0x8] sm:$0xff] %vm1318, %v1311
          %1320 = vst.msk [vmem:[%s426 + $0x10] sm:$0xff] %vm1316, %v1313
          %1321 = vst.msk [vmem:[%s426 + $0x18] sm:$0xff] %vm1318, %v1313
        $region60: #{tpu_custom_call.1} parent=43 // pred_fallthru
          _
        %s1322 = sand.u32 %s235, 1
        %s1323 = scalar_lea.sflag [#allocation4], %s1322
        %s1324 = sand.u32 %s235, 1
        %s1325 = smul.addr %s1324, 32
        %s1326 = scalar_lea.vmem [#allocation8], %s1325
        // Predicated region
        $region61: #{tpu_custom_call.1} parent=43 // pred_check
          %p1327 = pneg %p245
        $region62: #{tpu_custom_call.1} parent=43 // pred_check_branch
          %1329 = sbr.rel (%p1327) target = $region64
        $region63: #{tpu_custom_call.1} parent=43 // pred_region
          %s1331 = ssub.s32 512, 512
          %1332 = vsyncadd %s1323, %s1331
          %s1333 = smul.addr %s31, 4
          %s1334 = smul.addr %s30, 40
          %s1335 = sadd.s32 %s1333, %s1334
          %s1336 = smul.addr %s1335, 128
          %s1337 = scalar_lea.hbm %s6, %s1336
          %s1338 = sshll.u32 %s1326, 4
          %s1339 = int_to_ptr.vmem [resolvable:$true] %s1338
          %1344 = dma.vmem_to_hbm [thread:$0]  %s1339, 512, %s1337, %s1323, 256, 256, 16
        $region64: #{tpu_custom_call.1} parent=43 // pred_fallthru
          _
      $region44: #{tpu_custom_call.1} parent=5 // pred_fallthru
        _
      %p1345 = scmp.le.s32.totalorder 2, %s21
      // Predicated region
      $region65: #{tpu_custom_call.1} parent=5 // pred_check
        %p1346 = pneg %p1345
      $region66: #{tpu_custom_call.1} parent=5 // pred_check_branch
        %1348 = sbr.rel (%p1346) target = $region68
      $region67: #{tpu_custom_call.1} parent=5 // pred_region
        %s1349 = ssub.s32 %s21, 2
        // Predicated region
        $region69: #{tpu_custom_call.1} parent=67 // pred_check
          %p1350 = pneg %p251
        $region70: #{tpu_custom_call.1} parent=67 // pred_check_branch
          %1352 = sbr.rel (%p1350) target = $region72
        $region71: #{tpu_custom_call.1} parent=67 // pred_region
          %s1353 = sand.u32 %s236, 1
          %s1354 = scalar_lea.sflag [#allocation4], %s1353
          %s1355 = sand.u32 %s236, 1
          %s1356 = smul.addr %s1355, 32
          %s1357 = scalar_lea.vmem [#allocation8], %s1356
          %1358 = dma.done %s1354, 512
        $region72: #{tpu_custom_call.1} parent=67 // pred_fallthru
          _
      $region68: #{tpu_custom_call.1} parent=5 // pred_fallthru
        _
    $region6: #{tpu_custom_call.1} parent=1 // loop_footer
      %s25 = sadd.s32 1, %s21
    $region7: #{tpu_custom_call.1} parent=1 // loop_footer_branch
      %20 = sbr.rel target = $region3
    $region8: #{tpu_custom_call.1} parent=1 // loop_exit
      _
    %1359 = vsyncpa [#allocation3], 1
    %s1360 = scalar_lea.sflag [#allocation3], 1
    %1361 = vsyncpa %s1360, 1
    %1362 = vsyncpa [#allocation6], 1
    %s1363 = scalar_lea.sflag [#allocation6], 1
    %1364 = vsyncpa %s1363, 1
    %1365 = vsyncpa [#allocation4], 1
    %s1366 = scalar_lea.sflag [#allocation4], 1
    %1367 = vsyncpa %s1366, 1

</llo_original>
